<compile_context>
chip_gen: v6e
topology: v6e:2x2x1
jax: 0.10.0
libtpu: 0.0.40
codegen_flags: <defaults>
</compile_context>

<pallas_src>
import math
from functools import partial

import jax
import jax.numpy as jnp
from jax.experimental import pallas as pl
from jax.experimental.pallas import tpu as pltpu

D_K = 64
D_V = 64


# ----------------------------------------------------------------------------
# Kernel: one (batch, head-group, q-tile) per grid step.
# ----------------------------------------------------------------------------
def _sdpa_kernel(q_ref, k_ref, v_ref, m_ref, *out_refs, scale, return_attn):
    # q_ref : (1, bh, bq, d_k)  bf16
    # k_ref : (1, bh, lk, d_k)  bf16
    # v_ref : (1, bh, lk, d_v)  bf16
    # m_ref : (1, mh, mq, mk)   int8   (mh/mq/mk are 1 or full; broadcast here)
    q = q_ref[0] * scale                 # bf16; 1/sqrt(64)=0.125 is exact
    k = k_ref[0]
    v = v_ref[0]
    mask = m_ref[0]                      # int8, broadcastable against scores

    # scores[h,q,k] = sum_d q[h,q,d] * k[h,k,d] — contract last dims directly
    # (no in-kernel K transpose), f32 accumulation on the MXU.
    scores = jax.lax.dot_general(
        q, k,
        dimension_numbers=(((2,), (2,)), ((0,), (0,))),
        preferred_element_type=jnp.float32)                  # (bh, bq, lk) f32

    # torch.masked_fill_ semantics. Fully-masked rows end up uniform (1/lk),
    # exactly like the -1e9 reference (not NaN).
    scores = jnp.where(mask != 0, jnp.float32(-1e9), scores)

    # numerically stable softmax; statistics in f32
    m_row = jnp.max(scores, axis=-1, keepdims=True)
    p = jnp.exp(scores - m_row)
    denom = jnp.sum(p, axis=-1, keepdims=True)
    inv = 1.0 / denom                    # exact divide; only bh*bq elements

    if return_attn:
        attn = p * inv                   # exactly normalized rows for output
        ctx = jax.lax.dot_general(
            attn.astype(v.dtype), v,                         # bf16 MXU operands
            dimension_numbers=(((2,), (1,)), ((0,), (0,))),
            preferred_element_type=jnp.float32)              # (bh, bq, d_v) f32
        out_refs[0][0] = ctx.astype(out_refs[0].dtype)
        out_refs[1][0] = attn.astype(out_refs[1].dtype)
    else:
        # normalize AFTER the matmul: O(bq*d_v) multiplies instead of O(bq*lk)
        ctx = jax.lax.dot_general(
            p.astype(v.dtype), v,
            dimension_numbers=(((2,), (1,)), ((0,), (0,))),
            preferred_element_type=jnp.float32) * inv
        out_refs[0][0] = ctx.astype(out_refs[0].dtype)


# ----------------------------------------------------------------------------
# VMEM-aware tile selection
# ----------------------------------------------------------------------------
def _vmem_capacity_bytes():
    try:
        info = pltpu.get_tpu_info()
        cap = getattr(info, "vmem_capacity_bytes", None)
        if cap:
            return int(cap)
    except Exception:
        pass
    return 64 * 1024 * 1024      # conservative fallback (v7x per-TC VMEM)


def _select_tiles(h, lq, lk, dk, dv, out_bytes, attn_bytes, mask_shape,
                  return_attn, block_q, block_h, budget):
    if block_q is None:
        if lq <= 256:
            block_q = lq
        else:
            block_q = lq
            for cand in (256, 128, 64, 32, 16, 8):
                if lq % cand == 0:
                    block_q = cand
                    break
    assert lq % block_q == 0 and (block_q == lq or block_q % 8 == 0)
    n_q = lq // block_q

    def est(bh):
        kv_buf = 1 if n_q > 1 else 2           # Buffered(1) when iq-invariant
        mh = bh if mask_shape[1] != 1 else 1
        mq = block_q if mask_shape[2] != 1 else 1
        mk = lk if mask_shape[3] != 1 else 1
        e = 2 * bh * block_q * dk * 2                         # Q (bf16, x2)
        e += kv_buf * bh * lk * (dk + dv) * 2                 # K + V (bf16)
        e += 2 * mh * mq * mk * 1                             # mask (int8, x2)
        e += 2 * bh * block_q * dv * out_bytes                # ctx out (x2)
        if return_attn:
            e += 2 * bh * block_q * lk * attn_bytes           # attn out (x2)
        e += 3 * bh * block_q * lk * 4                        # f32 intermediates
        return e

    if block_h is None:
        block_h = 1
        for d in range(h, 0, -1):
            if h % d == 0 and est(d) <= budget:
                block_h = d
                break
    assert h % block_h == 0
    return block_q, block_h, est(block_h)


# ----------------------------------------------------------------------------
# Wrapper
# ----------------------------------------------------------------------------
def scaled_dot_product_attention(Q, K, V, attn_mask, *, return_attn=True,
                                 attn_dtype=None, block_q=None, block_h=None,
                                 vmem_limit_bytes=None):
    """Q,K: (b,h,lq|lk,d_k); V: (b,h,lk,d_v); attn_mask broadcastable to (b,h,lq,lk)."""
    b, h, lq, dk = Q.shape
    lk = K.shape[2]
    dv = V.shape[3]
    out_dtype = Q.dtype
    attn_dtype = out_dtype if attn_dtype is None else attn_dtype
    scale = 1.0 / math.sqrt(dk)

    # mask: keep it un-broadcast (broadcast dims handled by the BlockSpec /
    # inside the kernel), ship as int8 (1 byte per element).
    mask = attn_mask
    if mask.ndim != 4:
        mask = jnp.reshape(mask, (1,) * (4 - mask.ndim) + mask.shape)
    mb_, mh_, mq_, mk_ = mask.shape
    assert mb_ in (1, b) and mh_ in (1, h) and mq_ in (1, lq) and mk_ in (1, lk)
    mask_i8 = mask.astype(jnp.int8)

    cap = _vmem_capacity_bytes()
    budget = int(cap * 0.6)
    block_q, block_h, est_bytes = _select_tiles(
        h, lq, lk, dk, dv,
        jnp.dtype(out_dtype).itemsize, jnp.dtype(attn_dtype).itemsize,
        mask.shape, return_attn, block_q, block_h, budget)
    n_q = lq // block_q
    n_h = h // block_h

    if vmem_limit_bytes is None:
        vmem_limit_bytes = min(int(cap * 0.9), max(2 * est_bytes, 32 * 2 ** 20))

    # bf16 operands for the MXU / half the DMA bytes; f32 accumulation inside.
    qb = Q.astype(jnp.bfloat16)
    kb = K.astype(jnp.bfloat16)
    vb = V.astype(jnp.bfloat16)

    q_spec = pl.BlockSpec((1, block_h, block_q, dk),
                          lambda ib, ih, iq: (ib, ih, iq, 0))
    # K/V blocks do not change along the inner iq axis -> single-buffer them
    # (saves block_h*lk*(dk+dv)*2 bytes of VMEM with no pipelining loss).
    kv_kwargs = dict(pipeline_mode=pl.Buffered(1)) if n_q > 1 else {}
    k_spec = pl.BlockSpec((1, block_h, lk, dk),
                          lambda ib, ih, iq: (ib, ih, 0, 0), **kv_kwargs)
    v_spec = pl.BlockSpec((1, block_h, lk, dv),
                          lambda ib, ih, iq: (ib, ih, 0, 0), **kv_kwargs)

    m_block = (1,
               1 if mh_ == 1 else block_h,
               1 if mq_ == 1 else block_q,
               mk_)

    def m_index(ib, ih, iq):
        return (0 if mb_ == 1 else ib,
                0 if mh_ == 1 else ih,
                0 if mq_ == 1 else iq,
                0)

    m_spec = pl.BlockSpec(m_block, m_index)

    out_shapes = [jax.ShapeDtypeStruct((b, h, lq, dv), out_dtype)]
    out_specs = [pl.BlockSpec((1, block_h, block_q, dv),
                              lambda ib, ih, iq: (ib, ih, iq, 0))]
    if return_attn:
        out_shapes.append(jax.ShapeDtypeStruct((b, h, lq, lk), attn_dtype))
        out_specs.append(pl.BlockSpec((1, block_h, block_q, lk),
                                      lambda ib, ih, iq: (ib, ih, iq, 0)))

    outs = pl.pallas_call(
        partial(_sdpa_kernel, scale=scale, return_attn=return_attn),
        out_shape=tuple(out_shapes),
        grid=(b, n_h, n_q),
        in_specs=[q_spec, k_spec, v_spec, m_spec],
        out_specs=tuple(out_specs),
        compiler_params=pltpu.CompilerParams(
            # shard batch/head across megacore TCs; never split iq (would
            # re-DMA identical K/V on both cores).
            dimension_semantics=("parallel", "parallel", "arbitrary"),
            vmem_limit_bytes=int(vmem_limit_bytes)),
    )(qb, kb, vb, mask_i8)

    if return_attn:
        return outs[0], outs[1]
    return outs[0], None


# ----------------------------------------------------------------------------
# Pure-JAX f32 reference (mirrors the PyTorch forward)
# ----------------------------------------------------------------------------
def reference(Q, K, V, attn_mask):
    scores = jnp.einsum("bhqd,bhkd->bhqk", Q, K) / math.sqrt(Q.shape[-1])
    scores = jnp.where(attn_mask, jnp.float32(-1e9), scores)
    attn = jax.nn.softmax(scores, axis=-1)
    ctx = jnp.einsum("bhqk,bhkd->bhqd", attn, V)
    return ctx, attn


if __name__ == "__main__":
    # --- test 1: the module's nominal small shape, full (b,h,lq,lk) mask ----
    key = jax.random.PRNGKey(0)
    kq, kk, kv, km = jax.random.split(key, 4)

    batch, n_heads, seq = 2, 8, 8
    Q = jax.random.normal(kq, (batch, n_heads, seq, D_K), jnp.float32)
    K = jax.random.normal(kk, (batch, n_heads, seq, D_K), jnp.float32)
    V = jax.random.normal(kv, (batch, n_heads, seq, D_V), jnp.float32)
    attn_mask = jax.random.bernoulli(km, 0.3, (batch, n_heads, seq, seq))  # bool

    ctx, attn = scaled_dot_product_attention(Q, K, V, attn_mask)
    ctx = jax.block_until_ready(ctx)
    attn = jax.block_until_ready(attn)
    ref_ctx, ref_attn = reference(Q, K, V, attn_mask)

    assert ctx.shape == (batch, n_heads, seq, D_V)
    assert attn.shape == (batch, n_heads, seq, seq)
    assert jnp.allclose(attn, ref_attn, atol=3e-2, rtol=3e-2), \
        float(jnp.max(jnp.abs(attn - ref_attn)))
    assert jnp.allclose(ctx, ref_ctx, atol=3e-2, rtol=3e-2), \
        float(jnp.max(jnp.abs(ctx - ref_ctx)))

    # --- test 2: q-tiled + head-tiled + head-broadcast mask (exercises the
    #             Buffered(1) K/V path and in-kernel mask broadcast) ---------
    k2 = jax.random.PRNGKey(1)
    kq2, kk2, kv2, km2 = jax.random.split(k2, 4)
    b2, h2, s2 = 2, 8, 256
    Q2 = jax.random.normal(kq2, (b2, h2, s2, D_K), jnp.float32)
    K2 = jax.random.normal(kk2, (b2, h2, s2, D_K), jnp.float32)
    V2 = jax.random.normal(kv2, (b2, h2, s2, D_V), jnp.float32)
    mask2 = jax.random.bernoulli(km2, 0.3, (b2, 1, s2, s2))   # broadcast over heads

    ctx2, attn2 = scaled_dot_product_attention(Q2, K2, V2, mask2,
                                               block_q=128, block_h=4)
    ctx2 = jax.block_until_ready(ctx2)
    attn2 = jax.block_until_ready(attn2)
    ref_ctx2, ref_attn2 = reference(Q2, K2, V2, mask2)

    assert jnp.allclose(attn2, ref_attn2, atol=3e-2, rtol=3e-2), \
        float(jnp.max(jnp.abs(attn2 - ref_attn2)))
    assert jnp.allclose(ctx2, ref_ctx2, atol=3e-2, rtol=3e-2), \
        float(jnp.max(jnp.abs(ctx2 - ref_ctx2)))

    print("KERNEL_OK")
</pallas_src>

<mosaic_0001>
module attributes {stable_mosaic.version = 11 : i64} {
  func.func @_sdpa_kernel(%arg0: i32, %arg1: i32, %arg2: i32, %arg3: memref<1x8x8x64xbf16, #tpu.memory_space<vmem>>, %arg4: memref<1x8x8x64xbf16, #tpu.memory_space<vmem>>, %arg5: memref<1x8x8x64xbf16, #tpu.memory_space<vmem>>, %arg6: memref<1x8x8x8xi8, #tpu.memory_space<vmem>>, %arg7: memref<1x8x8x64xf32, #tpu.memory_space<vmem>>, %arg8: memref<1x8x8x8xf32, #tpu.memory_space<vmem>>) attributes {dimension_semantics = [#tpu.dimension_semantics<parallel>, #tpu.dimension_semantics<parallel>, #tpu.dimension_semantics<arbitrary>], iteration_bounds = array<i64: 2, 1, 1>, scalar_prefetch = 0 : i64, scratch_operands = 0 : i64, tpu.core_type = #tpu.core_type<tc>, window_params = [{transform_indices = @transform_0, window_bounds = array<i64: 1, 8, 8, 64>}, {transform_indices = @transform_1, window_bounds = array<i64: 1, 8, 8, 64>}, {transform_indices = @transform_2, window_bounds = array<i64: 1, 8, 8, 64>}, {transform_indices = @transform_3, window_bounds = array<i64: 1, 8, 8, 8>}, {transform_indices = @transform_4, window_bounds = array<i64: 1, 8, 8, 64>}, {transform_indices = @transform_5, window_bounds = array<i64: 1, 8, 8, 8>}]} {
    %c0 = arith.constant 0 : index
    %c0_0 = arith.constant 0 : index
    %c0_1 = arith.constant 0 : index
    %c0_2 = arith.constant 0 : index
    %0 = vector.load %arg3[%c0, %c0_0, %c0_1, %c0_2] : memref<1x8x8x64xbf16, #tpu.memory_space<vmem>>, vector<1x8x8x64xbf16>
    %1 = vector.shape_cast %0 : vector<1x8x8x64xbf16> to vector<8x8x64xbf16>
    %cst = arith.constant 1.250000e-01 : bf16
    %2 = vector.broadcast %cst : bf16 to vector<8x8x64xbf16>
    %3 = arith.mulf %1, %2 : vector<8x8x64xbf16>
    %c0_3 = arith.constant 0 : index
    %c0_4 = arith.constant 0 : index
    %c0_5 = arith.constant 0 : index
    %c0_6 = arith.constant 0 : index
    %4 = vector.load %arg4[%c0_3, %c0_4, %c0_5, %c0_6] : memref<1x8x8x64xbf16, #tpu.memory_space<vmem>>, vector<1x8x8x64xbf16>
    %5 = vector.shape_cast %4 : vector<1x8x8x64xbf16> to vector<8x8x64xbf16>
    %c0_7 = arith.constant 0 : index
    %c0_8 = arith.constant 0 : index
    %c0_9 = arith.constant 0 : index
    %c0_10 = arith.constant 0 : index
    %6 = vector.load %arg5[%c0_7, %c0_8, %c0_9, %c0_10] : memref<1x8x8x64xbf16, #tpu.memory_space<vmem>>, vector<1x8x8x64xbf16>
    %7 = vector.shape_cast %6 : vector<1x8x8x64xbf16> to vector<8x8x64xbf16>
    %c0_11 = arith.constant 0 : index
    %c0_12 = arith.constant 0 : index
    %c0_13 = arith.constant 0 : index
    %c0_14 = arith.constant 0 : index
    %8 = vector.load %arg6[%c0_11, %c0_12, %c0_13, %c0_14] : memref<1x8x8x8xi8, #tpu.memory_space<vmem>>, vector<1x8x8x8xi8>
    %9 = vector.shape_cast %8 : vector<1x8x8x8xi8> to vector<8x8x8xi8>
    %cst_15 = arith.constant dense<0.000000e+00> : vector<8x8x8xf32>
    %10 = tpu.matmul %3, %5, %cst_15 {dimension_numbers = #tpu.dot_dimension_numbers<[2], [2], [1], [1], [0, 0, 0, 1, 1, 1], [0], [0]>} : vector<8x8x64xbf16>, vector<8x8x64xbf16>, vector<8x8x8xf32> -> vector<8x8x8xf32>
    %c0_i8 = arith.constant 0 : i8
    %11 = vector.broadcast %c0_i8 : i8 to vector<8x8x8xi8>
    %12 = arith.cmpi ne, %9, %11 : vector<8x8x8xi8>
    %cst_16 = arith.constant -1.000000e+09 : f32
    %13 = vector.broadcast %cst_16 : f32 to vector<8x8x8xf32>
    %14 = arith.select %12, %13, %10 : vector<8x8x8xi1>, vector<8x8x8xf32>
    %cst_17 = arith.constant dense<0xFF800000> : vector<8x8xf32>
    %15 = vector.multi_reduction <maximumf>, %14, %cst_17 [2] : vector<8x8x8xf32> to vector<8x8xf32>
    %16 = vector.shape_cast %15 : vector<8x8xf32> to vector<8x8x1xf32>
    %17 = vector.broadcast %16 : vector<8x8x1xf32> to vector<8x8x8xf32>
    %18 = arith.subf %14, %17 : vector<8x8x8xf32>
    %19 = math.exp %18 : vector<8x8x8xf32>
    %cst_18 = arith.constant dense<0.000000e+00> : vector<8x8xf32>
    %20 = vector.multi_reduction <add>, %19, %cst_18 [2] : vector<8x8x8xf32> to vector<8x8xf32>
    %21 = vector.shape_cast %20 : vector<8x8xf32> to vector<8x8x1xf32>
    %cst_19 = arith.constant 1.000000e+00 : f32
    %22 = vector.broadcast %cst_19 : f32 to vector<8x8x1xf32>
    %23 = arith.divf %22, %21 : vector<8x8x1xf32>
    %24 = vector.broadcast %23 : vector<8x8x1xf32> to vector<8x8x8xf32>
    %25 = arith.mulf %19, %24 : vector<8x8x8xf32>
    %26 = arith.truncf %25 : vector<8x8x8xf32> to vector<8x8x8xbf16>
    %cst_20 = arith.constant dense<0.000000e+00> : vector<8x8x64xf32>
    %27 = tpu.matmul %26, %7, %cst_20 {dimension_numbers = #tpu.dot_dimension_numbers<[2], [1], [1], [2], [0, 0, 0, 1, 1, 2], [0], [0]>} : vector<8x8x8xbf16>, vector<8x8x64xbf16>, vector<8x8x64xf32> -> vector<8x8x64xf32>
    %c0_21 = arith.constant 0 : index
    %c0_22 = arith.constant 0 : index
    %c0_23 = arith.constant 0 : index
    %c0_24 = arith.constant 0 : index
    %28 = vector.load %arg7[%c0_21, %c0_22, %c0_23, %c0_24] : memref<1x8x8x64xf32, #tpu.memory_space<vmem>>, vector<1x8x8x64xf32>
    %29 = vector.shape_cast %28 : vector<1x8x8x64xf32> to vector<8x8x64xf32>
    %30 = vector.shape_cast %27 : vector<8x8x64xf32> to vector<1x8x8x64xf32>
    tpu.vector_store %arg7[%c0_21, %c0_22, %c0_23, %c0_24], %30 {strides = array<i32>} : memref<1x8x8x64xf32, #tpu.memory_space<vmem>>, vector<1x8x8x64xf32>,
    %c0_25 = arith.constant 0 : index
    %c0_26 = arith.constant 0 : index
    %c0_27 = arith.constant 0 : index
    %c0_28 = arith.constant 0 : index
    %31 = vector.load %arg8[%c0_25, %c0_26, %c0_27, %c0_28] : memref<1x8x8x8xf32, #tpu.memory_space<vmem>>, vector<1x8x8x8xf32>
    %32 = vector.shape_cast %31 : vector<1x8x8x8xf32> to vector<8x8x8xf32>
    %33 = vector.shape_cast %25 : vector<8x8x8xf32> to vector<1x8x8x8xf32>
    tpu.vector_store %arg8[%c0_25, %c0_26, %c0_27, %c0_28], %33 {strides = array<i32>} : memref<1x8x8x8xf32, #tpu.memory_space<vmem>>, vector<1x8x8x8xf32>,
    return
  }
  func.func @transform_0(%arg0: i32, %arg1: i32, %arg2: i32) -> (i32, i32, i32, i32) {
    %c0_i32 = arith.constant 0 : i32
    %c0_i32_0 = arith.constant 0 : i32
    return %arg0, %arg1, %arg2, %c0_i32 : i32, i32, i32, i32
  }
  func.func @transform_1(%arg0: i32, %arg1: i32, %arg2: i32) -> (i32, i32, i32, i32) {
    %c0_i32 = arith.constant 0 : i32
    %c0_i32_0 = arith.constant 0 : i32
    %c0_i32_1 = arith.constant 0 : i32
    return %arg0, %arg1, %c0_i32, %c0_i32_0 : i32, i32, i32, i32
  }
  func.func @transform_2(%arg0: i32, %arg1: i32, %arg2: i32) -> (i32, i32, i32, i32) {
    %c0_i32 = arith.constant 0 : i32
    %c0_i32_0 = arith.constant 0 : i32
    %c0_i32_1 = arith.constant 0 : i32
    return %arg0, %arg1, %c0_i32, %c0_i32_0 : i32, i32, i32, i32
  }
  func.func @transform_3(%arg0: i32, %arg1: i32, %arg2: i32) -> (i32, i32, i32, i32) {
    %c0_i32 = arith.constant 0 : i32
    %c0_i32_0 = arith.constant 0 : i32
    return %arg0, %arg1, %arg2, %c0_i32 : i32, i32, i32, i32
  }
  func.func @transform_4(%arg0: i32, %arg1: i32, %arg2: i32) -> (i32, i32, i32, i32) {
    %c0_i32 = arith.constant 0 : i32
    %c0_i32_0 = arith.constant 0 : i32
    return %arg0, %arg1, %arg2, %c0_i32 : i32, i32, i32, i32
  }
  func.func @transform_5(%arg0: i32, %arg1: i32, %arg2: i32) -> (i32, i32, i32, i32) {
    %c0_i32 = arith.constant 0 : i32
    %c0_i32_0 = arith.constant 0 : i32
    return %arg0, %arg1, %arg2, %c0_i32 : i32, i32, i32, i32
  }
}

</mosaic_0001>

<llo_original>
// kernel: tpu_custom_call.1
$region0: #{tpu_custom_call.1}
  #allocation0 [shape = 'u32[]', space=smem, size = 0x4, offset = 0x4, fixed_abs, tag = 'smem constant byte address 0x4 - core index']
  #allocation1 [shape = 'u32[144,128]{1,0:T(1,128)}', space=vmem, size = 0x12000, scoped, tag = 'internal scratch']
  %s0 = inlined_call_operand.hbm [shape: bf16[2,8,8,64], index: 0, kind: input, shape index: {}]
  %s1 = inlined_call_operand.hbm [shape: bf16[2,8,8,64], index: 1, kind: input, shape index: {}]
  %s2 = inlined_call_operand.hbm [shape: bf16[2,8,8,64], index: 2, kind: input, shape index: {}]
  %s3 = inlined_call_operand.hbm [shape: s8[2,8,8,8], index: 3, kind: input, shape index: {}]
  %s4 = inlined_call_operand.hbm [shape: f32[2,8,8,64], index: 4, kind: output, shape index: {0}]
  %s5 = inlined_call_operand.hbm [shape: f32[2,8,8,8], index: 5, kind: output, shape index: {1}]
  %6 = xla_tuple %s4, %s5
  %s7 = sld [smem:[#allocation0]]
  $region73: #{tpu_custom_call.1} parent=0
    _
  %s9 = ssub.s32 1, %s7
  %s10 = scalar_select 0, %s9, %s7
  $region1: #{tpu_custom_call.1} parent=0
    #allocation2 [shape = 'u8[32768]{0}', space=vmem, size = 0x8000, scoped, tag = 'input window, operand 0']
    #allocation3 [shape = 's32[2]{0}', space=sflag, size = 0x8, scoped, tag = 'scoped memory for tpu_custom_call.1']
    #allocation4 [shape = 's32[2]{0}', space=sflag, size = 0x8, scoped, tag = 'scoped memory for tpu_custom_call.1']
    #allocation5 [shape = 'u8[32768]{0}', space=vmem, size = 0x8000, scoped, tag = 'input window, operand 1']
    #allocation6 [shape = 's32[2]{0}', space=sflag, size = 0x8, scoped, tag = 'scoped memory for tpu_custom_call.1']
    #allocation7 [shape = 'u8[32768]{0}', space=vmem, size = 0x8000, scoped, tag = 'input window, operand 2']
    #allocation8 [shape = 'u8[16384]{0}', space=vmem, size = 0x4000, scoped, tag = 'input window, operand 3']
    #allocation9 [shape = 's32[2]{0}', space=sflag, size = 0x8, scoped, tag = 'scoped memory for tpu_custom_call.1']
    #allocation10 [shape = 'u8[65536]{0}', space=vmem, size = 0x10000, scoped, tag = 'output window, operand 0']
    #allocation11 [shape = 'u8[65536]{0}', space=vmem, size = 0x10000, scoped, tag = 'output window, operand 1']
    #allocation12 [shape = 's32[2]{0}', space=sflag, size = 0x8, scoped, tag = 'scoped memory for tpu_custom_call.1']
    %11 = vsyncpa [#allocation3], 0
    %s12 = scalar_lea.sflag [#allocation3], 1
    %13 = vsyncpa %s12, 0
    %14 = vsyncpa [#allocation6], 0
    %s15 = scalar_lea.sflag [#allocation6], 1
    %16 = vsyncpa %s15, 0
    %17 = vsyncpa [#allocation9], 0
    %s18 = scalar_lea.sflag [#allocation9], 1
    %19 = vsyncpa %s18, 0
    %20 = vsyncpa [#allocation4], 0
    %s21 = scalar_lea.sflag [#allocation4], 1
    %22 = vsyncpa %s21, 0
    %23 = vsyncpa [#allocation12], 0
    %s24 = scalar_lea.sflag [#allocation12], 1
    %25 = vsyncpa %s24, 0
    loop: start=0, step=1, limit=4
    $region2: #{tpu_custom_call.1} parent=1 // loop_pre_header
      _
    $region3: #{tpu_custom_call.1} parent=1 // loop_header
      %s27 = sphi 0, %s31
      %p28 = scmp.ge.s32.totalorder %s27, 4
      %s34 = sphi 0, %s53
      %s35 = sphi 0, %s49
      %s36 = sphi 0, %s45
      %s37 = sphi 0, %s34
      %s38 = sphi 0, %s35
      %s39 = sphi 0, %s36
      %s40 = sphi 0, %s37
      %s41 = sphi 0, %s38
      %s42 = sphi 0, %s39
      %s60 = sphi 0, %s62
      %s63 = sphi 0, %s60
      %s64 = sphi 0, %s63
      %s80 = sphi 0, %s64
      %s88 = sphi 0, %s90
      %s91 = sphi 0, %s88
      %s92 = sphi 0, %s91
      %s108 = sphi 0, %s92
      %s116 = sphi 0, %s118
      %s119 = sphi 0, %s116
      %s120 = sphi 0, %s119
      %s136 = sphi 0, %s120
      %s146 = sphi 0, %s148
      %s149 = sphi 0, %s146
      %s150 = sphi 0, %s149
      %s166 = sphi 0, %s150
      %s176 = sphi 0, %s178
      %s179 = sphi 0, %s176
      %s180 = sphi 0, %s179
      %s196 = sphi 0, %s180
      %s206 = sphi 0, %s208
      %s209 = sphi 0, %s206
      %s210 = sphi 0, %s209
      %s226 = sphi 0, %s210
    $region4: #{tpu_custom_call.1} parent=1 // loop_header_branch
      %30 = sbr.rel (%p28) target = $region8
    $region5: #{tpu_custom_call.1} parent=1 // loop_body
      %s32 = ssub.s32 %s27, 1
      %s33 = ssub.s32 %s27, 2
      %s43 = sadd.s32 1, %s36
      %p44 = scmp.ge.s32.totalorder %s43, 1
      %s45 = scalar_select %p44, 0, %s43
      %s46 = sadd.s32 1, %s35
      %s47 = scalar_select %p44, %s46, %s35
      %p48 = scmp.ge.s32.totalorder %s47, 1
      %s49 = scalar_select %p48, 0, %s47
      %s50 = sadd.s32 1, %s34
      %s51 = scalar_select %p48, %s50, %s34
      %p52 = scmp.ge.s32.totalorder %s51, 2
      %s53 = scalar_select %p52, 0, %s51
      %s54 = ssub.s32 %s34, %s53
      %s55 = ssub.s32 %s35, %s49
      %s56 = sor.u32 %s54, %s55
      %s57 = ssub.s32 %s36, %s45
      %s58 = sor.u32 %s56, %s57
      %p59 = scmp.eq.s32.totalorder %s58, 0
      %s61 = sadd.s32 %s60, 1
      %s62 = scalar_select %p59, %s60, %s61
      %p65 = pneg %p59
      %p66 = scmp.eq.s32.totalorder %s27, 1
      %p67 = por %p65, %p66
      %p68 = scmp.ne.s32.totalorder %s60, %s63
      %p69 = scmp.eq.s32.totalorder %s27, 0
      %p70 = por %p68, %p69
      %p71 = scmp.ne.s32.totalorder %s60, %s63
      %p72 = scmp.eq.s32.totalorder %s32, 1
      %p73 = por %p71, %p72
      %p74 = scmp.ne.s32.totalorder %s63, %s64
      %p75 = scmp.eq.s32.totalorder %s32, 0
      %p76 = por %p74, %p75
      %p77 = scmp.ne.s32.totalorder %s63, %s64
      %p78 = scmp.eq.s32.totalorder %s33, 1
      %p79 = por %p77, %p78
      %p81 = scmp.ne.s32.totalorder %s64, %s80
      %p82 = scmp.eq.s32.totalorder %s33, 0
      %p83 = por %p81, %p82
      %s84 = ssub.s32 %s34, %s53
      %s85 = ssub.s32 %s35, %s49
      %s86 = sor.u32 %s84, %s85
      %p87 = scmp.eq.s32.totalorder %s86, 0
      %s89 = sadd.s32 %s88, 1
      %s90 = scalar_select %p87, %s88, %s89
      %p93 = pneg %p87
      %p94 = scmp.eq.s32.totalorder %s27, 1
      %p95 = por %p93, %p94
      %p96 = scmp.ne.s32.totalorder %s88, %s91
      %p97 = scmp.eq.s32.totalorder %s27, 0
      %p98 = por %p96, %p97
      %p99 = scmp.ne.s32.totalorder %s88, %s91
      %p100 = scmp.eq.s32.totalorder %s32, 1
      %p101 = por %p99, %p100
      %p102 = scmp.ne.s32.totalorder %s91, %s92
      %p103 = scmp.eq.s32.totalorder %s32, 0
      %p104 = por %p102, %p103
      %p105 = scmp.ne.s32.totalorder %s91, %s92
      %p106 = scmp.eq.s32.totalorder %s33, 1
      %p107 = por %p105, %p106
      %p109 = scmp.ne.s32.totalorder %s92, %s108
      %p110 = scmp.eq.s32.totalorder %s33, 0
      %p111 = por %p109, %p110
      %s112 = ssub.s32 %s34, %s53
      %s113 = ssub.s32 %s35, %s49
      %s114 = sor.u32 %s112, %s113
      %p115 = scmp.eq.s32.totalorder %s114, 0
      %s117 = sadd.s32 %s116, 1
      %s118 = scalar_select %p115, %s116, %s117
      %p121 = pneg %p115
      %p122 = scmp.eq.s32.totalorder %s27, 1
      %p123 = por %p121, %p122
      %p124 = scmp.ne.s32.totalorder %s116, %s119
      %p125 = scmp.eq.s32.totalorder %s27, 0
      %p126 = por %p124, %p125
      %p127 = scmp.ne.s32.totalorder %s116, %s119
      %p128 = scmp.eq.s32.totalorder %s32, 1
      %p129 = por %p127, %p128
      %p130 = scmp.ne.s32.totalorder %s119, %s120
      %p131 = scmp.eq.s32.totalorder %s32, 0
      %p132 = por %p130, %p131
      %p133 = scmp.ne.s32.totalorder %s119, %s120
      %p134 = scmp.eq.s32.totalorder %s33, 1
      %p135 = por %p133, %p134
      %p137 = scmp.ne.s32.totalorder %s120, %s136
      %p138 = scmp.eq.s32.totalorder %s33, 0
      %p139 = por %p137, %p138
      %s140 = ssub.s32 %s34, %s53
      %s141 = ssub.s32 %s35, %s49
      %s142 = sor.u32 %s140, %s141
      %s143 = ssub.s32 %s36, %s45
      %s144 = sor.u32 %s142, %s143
      %p145 = scmp.eq.s32.totalorder %s144, 0
      %s147 = sadd.s32 %s146, 1
      %s148 = scalar_select %p145, %s146, %s147
      %p151 = pneg %p145
      %p152 = scmp.eq.s32.totalorder %s27, 1
      %p153 = por %p151, %p152
      %p154 = scmp.ne.s32.totalorder %s146, %s149
      %p155 = scmp.eq.s32.totalorder %s27, 0
      %p156 = por %p154, %p155
      %p157 = scmp.ne.s32.totalorder %s146, %s149
      %p158 = scmp.eq.s32.totalorder %s32, 1
      %p159 = por %p157, %p158
      %p160 = scmp.ne.s32.totalorder %s149, %s150
      %p161 = scmp.eq.s32.totalorder %s32, 0
      %p162 = por %p160, %p161
      %p163 = scmp.ne.s32.totalorder %s149, %s150
      %p164 = scmp.eq.s32.totalorder %s33, 1
      %p165 = por %p163, %p164
      %p167 = scmp.ne.s32.totalorder %s150, %s166
      %p168 = scmp.eq.s32.totalorder %s33, 0
      %p169 = por %p167, %p168
      %s170 = ssub.s32 %s34, %s53
      %s171 = ssub.s32 %s35, %s49
      %s172 = sor.u32 %s170, %s171
      %s173 = ssub.s32 %s36, %s45
      %s174 = sor.u32 %s172, %s173
      %p175 = scmp.eq.s32.totalorder %s174, 0
      %s177 = sadd.s32 %s176, 1
      %s178 = scalar_select %p175, %s176, %s177
      %p181 = pneg %p175
      %p182 = scmp.eq.s32.totalorder %s27, 1
      %p183 = por %p181, %p182
      %p184 = scmp.ne.s32.totalorder %s176, %s179
      %p185 = scmp.eq.s32.totalorder %s27, 0
      %p186 = por %p184, %p185
      %p187 = scmp.ne.s32.totalorder %s176, %s179
      %p188 = scmp.eq.s32.totalorder %s32, 1
      %p189 = por %p187, %p188
      %p190 = scmp.ne.s32.totalorder %s179, %s180
      %p191 = scmp.eq.s32.totalorder %s32, 0
      %p192 = por %p190, %p191
      %p193 = scmp.ne.s32.totalorder %s179, %s180
      %p194 = scmp.eq.s32.totalorder %s33, 1
      %p195 = por %p193, %p194
      %p197 = scmp.ne.s32.totalorder %s180, %s196
      %p198 = scmp.eq.s32.totalorder %s33, 0
      %p199 = por %p197, %p198
      %s200 = ssub.s32 %s34, %s53
      %s201 = ssub.s32 %s35, %s49
      %s202 = sor.u32 %s200, %s201
      %s203 = ssub.s32 %s36, %s45
      %s204 = sor.u32 %s202, %s203
      %p205 = scmp.eq.s32.totalorder %s204, 0
      %s207 = sadd.s32 %s206, 1
      %s208 = scalar_select %p205, %s206, %s207
      %p211 = pneg %p205
      %p212 = scmp.eq.s32.totalorder %s27, 1
      %p213 = por %p211, %p212
      %p214 = scmp.ne.s32.totalorder %s206, %s209
      %p215 = scmp.eq.s32.totalorder %s27, 0
      %p216 = por %p214, %p215
      %p217 = scmp.ne.s32.totalorder %s206, %s209
      %p218 = scmp.eq.s32.totalorder %s32, 1
      %p219 = por %p217, %p218
      %p220 = scmp.ne.s32.totalorder %s209, %s210
      %p221 = scmp.eq.s32.totalorder %s32, 0
      %p222 = por %p220, %p221
      %p223 = scmp.ne.s32.totalorder %s209, %s210
      %p224 = scmp.eq.s32.totalorder %s33, 1
      %p225 = por %p223, %p224
      %p227 = scmp.ne.s32.totalorder %s210, %s226
      %p228 = scmp.eq.s32.totalorder %s33, 0
      %p229 = por %p227, %p228
      %p230 = scmp.le.s32.totalorder 1, %s27
      %p231 = scmp.lt.s32.totalorder %s27, 3
      %p232 = pnand %p230, %p231
      %p233 = pneg %p232
      // Predicated region
      $region9: #{tpu_custom_call.1} parent=5 // pred_check
        _
      $region10: #{tpu_custom_call.1} parent=5 // pred_check_branch
        %235 = sbr.rel (%p232) target = $region12
      $region11: #{tpu_custom_call.1} parent=5 // pred_region
        %s236 = ssub.s32 %s27, 1
      $region12: #{tpu_custom_call.1} parent=5 // pred_fallthru
        _
      %p237 = scmp.lt.s32.totalorder %s27, 2
      // Predicated region
      $region13: #{tpu_custom_call.1} parent=5 // pred_check
        %p238 = pneg %p237
      $region14: #{tpu_custom_call.1} parent=5 // pred_check_branch
        %240 = sbr.rel (%p238) target = $region16
      $region15: #{tpu_custom_call.1} parent=5 // pred_region
        // Predicated region
        $region17: #{tpu_custom_call.1} parent=15 // pred_check
          %p241 = pneg %p70
        $region18: #{tpu_custom_call.1} parent=15 // pred_check_branch
          %243 = sbr.rel (%p241) target = $region20
        $region19: #{tpu_custom_call.1} parent=15 // pred_region
          %s244 = sand.u32 %s60, 1
          %s245 = scalar_lea.sflag [#allocation3], %s244
          %s246 = sand.u32 %s60, 1
          %s247 = smul.addr %s246, 32
          %s248 = scalar_lea.vmem [#allocation2], %s247
          %s249 = smul.u32 8, %s35
          %s251 = ssub.s32 512, 512
          %252 = vsyncadd %s245, %s251
          %s253 = sadd.s32 %s36, %s249
          %s254 = smul.addr %s34, 8
          %s255 = sadd.s32 %s253, %s254
          %s256 = smul.addr %s255, 64
          %s257 = scalar_lea.hbm %s0, %s256
          %s258 = sshll.u32 %s248, 4
          %s259 = int_to_ptr.vmem [resolvable:$true] %s258
          %264 = dma.hbm_to_vmem [thread:$0]  %s257, 512, %s259, %s245, 64, 64, 4
        $region20: #{tpu_custom_call.1} parent=15 // pred_fallthru
          _
        // Predicated region
        $region21: #{tpu_custom_call.1} parent=15 // pred_check
          %p265 = pneg %p98
        $region22: #{tpu_custom_call.1} parent=15 // pred_check_branch
          %267 = sbr.rel (%p265) target = $region24
        $region23: #{tpu_custom_call.1} parent=15 // pred_region
          %s268 = sand.u32 %s27, 1
          %s269 = scalar_lea.sflag [#allocation6], %s268
          %s270 = sand.u32 %s88, 1
          %s271 = smul.addr %s270, 32
          %s272 = scalar_lea.vmem [#allocation5], %s271
          %s273 = smul.u32 8, %s35
          %s275 = ssub.s32 512, 512
          %276 = vsyncadd %s269, %s275
          %s277 = smul.addr %s34, 8
          %s278 = sadd.s32 %s273, %s277
          %s279 = smul.addr %s278, 64
          %s280 = scalar_lea.hbm %s1, %s279
          %s281 = sshll.u32 %s272, 4
          %s282 = int_to_ptr.vmem [resolvable:$true] %s281
          %287 = dma.hbm_to_vmem [thread:$0]  %s280, 512, %s282, %s269, 64, 64, 4
        $region24: #{tpu_custom_call.1} parent=15 // pred_fallthru
          _
        // Predicated region
        $region25: #{tpu_custom_call.1} parent=15 // pred_check
          %p288 = pneg %p126
        $region26: #{tpu_custom_call.1} parent=15 // pred_check_branch
          %290 = sbr.rel (%p288) target = $region28
        $region27: #{tpu_custom_call.1} parent=15 // pred_region
          %s291 = sand.u32 %s27, 1
          %s292 = scalar_lea.sflag [#allocation6], %s291
          %s293 = sand.u32 %s116, 1
          %s294 = smul.addr %s293, 32
          %s295 = scalar_lea.vmem [#allocation7], %s294
          %s296 = smul.u32 8, %s35
          %s298 = ssub.s32 512, 512
          %299 = vsyncadd %s292, %s298
          %s300 = smul.addr %s34, 8
          %s301 = sadd.s32 %s296, %s300
          %s302 = smul.addr %s301, 64
          %s303 = scalar_lea.hbm %s2, %s302
          %s304 = sshll.u32 %s295, 4
          %s305 = int_to_ptr.vmem [resolvable:$true] %s304
          %310 = dma.hbm_to_vmem [thread:$0]  %s303, 512, %s305, %s292, 64, 64, 4
        $region28: #{tpu_custom_call.1} parent=15 // pred_fallthru
          _
        // Predicated region
        $region29: #{tpu_custom_call.1} parent=15 // pred_check
          %p311 = pneg %p156
        $region30: #{tpu_custom_call.1} parent=15 // pred_check_branch
          %313 = sbr.rel (%p311) target = $region32
        $region31: #{tpu_custom_call.1} parent=15 // pred_region
          %s314 = sand.u32 %s146, 1
          %s315 = scalar_lea.sflag [#allocation9], %s314
          %s316 = sand.u32 %s146, 1
          %s317 = smul.addr %s316, 16
          %s318 = scalar_lea.vmem [#allocation8], %s317
          %s319 = smul.u32 8, %s35
          %s321 = ssub.s32 256, 256
          %322 = vsyncadd %s315, %s321
          %s323 = sadd.s32 %s36, %s319
          %s324 = smul.addr %s34, 8
          %s325 = sadd.s32 %s323, %s324
          %s326 = smul.addr %s325, 32
          %s327 = scalar_lea.hbm %s3, %s326
          %s328 = sshll.u32 %s318, 4
          %s329 = int_to_ptr.vmem [resolvable:$true] %s328
          %334 = dma.hbm_to_vmem [thread:$0]  %s327, 256, %s329, %s315, 32, 32, 2
        $region32: #{tpu_custom_call.1} parent=15 // pred_fallthru
          _
      $region16: #{tpu_custom_call.1} parent=5 // pred_fallthru
        _
      %p335 = scmp.le.s32.totalorder 1, %s27
      %p336 = scmp.lt.s32.totalorder %s27, 3
      %p337 = pnand %p335, %p336
      %p338 = pneg %p337
      // Predicated region
      $region33: #{tpu_custom_call.1} parent=5 // pred_check
        _
      $region34: #{tpu_custom_call.1} parent=5 // pred_check_branch
        %340 = sbr.rel (%p337) target = $region36
      $region35: #{tpu_custom_call.1} parent=5 // pred_region
        %s341 = ssub.s32 %s27, 1
        %s342 = sand.u32 %s63, 1
        %s343 = scalar_lea.sflag [#allocation3], %s342
        %s344 = sand.u32 %s63, 1
        %s345 = smul.addr %s344, 32
        %s346 = scalar_lea.vmem [#allocation2], %s345
        // Predicated region
        $region37: #{tpu_custom_call.1} parent=35 // pred_check
          %p347 = pneg %p76
        $region38: #{tpu_custom_call.1} parent=35 // pred_check_branch
          %349 = sbr.rel (%p347) target = $region40
        $region39: #{tpu_custom_call.1} parent=35 // pred_region
          %350 = dma.done %s343, 512
        $region40: #{tpu_custom_call.1} parent=35 // pred_fallthru
          _
        %s351 = sand.u32 %s32, 1
        %s352 = scalar_lea.sflag [#allocation6], %s351
        %s353 = sand.u32 %s91, 1
        %s354 = smul.addr %s353, 32
        %s355 = scalar_lea.vmem [#allocation5], %s354
        // Predicated region
        $region41: #{tpu_custom_call.1} parent=35 // pred_check
          %p356 = pneg %p104
        $region42: #{tpu_custom_call.1} parent=35 // pred_check_branch
          %358 = sbr.rel (%p356) target = $region44
        $region43: #{tpu_custom_call.1} parent=35 // pred_region
          %359 = dma.done %s352, 512
        $region44: #{tpu_custom_call.1} parent=35 // pred_fallthru
          _
        %s360 = sand.u32 %s32, 1
        %s361 = scalar_lea.sflag [#allocation6], %s360
        %s362 = sand.u32 %s119, 1
        %s363 = smul.addr %s362, 32
        %s364 = scalar_lea.vmem [#allocation7], %s363
        // Predicated region
        $region45: #{tpu_custom_call.1} parent=35 // pred_check
          %p365 = pneg %p132
        $region46: #{tpu_custom_call.1} parent=35 // pred_check_branch
          %367 = sbr.rel (%p365) target = $region48
        $region47: #{tpu_custom_call.1} parent=35 // pred_region
          %368 = dma.done %s361, 512
        $region48: #{tpu_custom_call.1} parent=35 // pred_fallthru
          _
        %s369 = sand.u32 %s149, 1
        %s370 = scalar_lea.sflag [#allocation9], %s369
        %s371 = sand.u32 %s149, 1
        %s372 = smul.addr %s371, 16
        %s373 = scalar_lea.vmem [#allocation8], %s372
        // Predicated region
        $region49: #{tpu_custom_call.1} parent=35 // pred_check
          %p374 = pneg %p162
        $region50: #{tpu_custom_call.1} parent=35 // pred_check_branch
          %376 = sbr.rel (%p374) target = $region52
        $region51: #{tpu_custom_call.1} parent=35 // pred_region
          %377 = dma.done %s370, 256
        $region52: #{tpu_custom_call.1} parent=35 // pred_fallthru
          _
        %s378 = sand.u32 %s63, 1
        %s379 = scalar_lea.sflag [#allocation3], %s378
        %s380 = sand.u32 %s63, 1
        %s381 = smul.addr %s380, 32
        %s382 = scalar_lea.vmem [#allocation2], %s381
        %p383 = pneg %p76
        %p384 = pneg %p73
        %s385 = sand.u32 %s32, 1
        %s386 = scalar_lea.sflag [#allocation6], %s385
        %s387 = sand.u32 %s91, 1
        %s388 = smul.addr %s387, 32
        %s389 = scalar_lea.vmem [#allocation5], %s388
        %p390 = pneg %p104
        %p391 = pneg %p101
        %s392 = sand.u32 %s32, 1
        %s393 = scalar_lea.sflag [#allocation6], %s392
        %s394 = sand.u32 %s119, 1
        %s395 = smul.addr %s394, 32
        %s396 = scalar_lea.vmem [#allocation7], %s395
        %p397 = pneg %p132
        %p398 = pneg %p129
        %s399 = sand.u32 %s149, 1
        %s400 = scalar_lea.sflag [#allocation9], %s399
        %s401 = sand.u32 %s149, 1
        %s402 = smul.addr %s401, 16
        %s403 = scalar_lea.vmem [#allocation8], %s402
        %p404 = pneg %p162
        %p405 = pneg %p159
        %p406 = pneg %p192
        %p407 = pneg %p189
        %s408 = sand.u32 %s179, 1
        %s409 = scalar_lea.sflag [#allocation4], %s408
        %s410 = sand.u32 %s179, 1
        %s411 = smul.addr %s410, 64
        %s412 = scalar_lea.vmem [#allocation10], %s411
        %p413 = pneg %p222
        %p414 = pneg %p219
        %s415 = sand.u32 %s209, 1
        %s416 = scalar_lea.sflag [#allocation12], %s415
        %s417 = sand.u32 %s209, 1
        %s418 = smul.addr %s417, 64
        %s419 = scalar_lea.vmem [#allocation11], %s418
        %s420 = smul.u32 8, %s38
        %s421 = smul.u32 8, %s38
        %s422 = smul.u32 8, %s38
        %s423 = smul.u32 8, %s38
        %s424 = smul.u32 8, %s38
        %s425 = smul.u32 8, %s38
        %v430 = vld [vmem:[%s346] sm:$0xf]
        %v431 = vld [vmem:[%s346 + $0x4] sm:$0xf]
        %v432 = vld [vmem:[%s346 + $0x8] sm:$0xf]
        %v433 = vld [vmem:[%s346 + $0xc] sm:$0xf]
        %v434 = vld [vmem:[%s346 + $0x10] sm:$0xf]
        %v435 = vld [vmem:[%s346 + $0x14] sm:$0xf]
        %v436 = vld [vmem:[%s346 + $0x18] sm:$0xf]
        %v437 = vld [vmem:[%s346 + $0x1c] sm:$0xf]
        %v438 = vmul.bf16 %v430, 1040203264
        %v439 = vmul.bf16 %v431, 1040203264
        %v440 = vmul.bf16 %v432, 1040203264
        %v441 = vmul.bf16 %v433, 1040203264
        %v442 = vmul.bf16 %v434, 1040203264
        %v443 = vmul.bf16 %v435, 1040203264
        %v444 = vmul.bf16 %v436, 1040203264
        %v445 = vmul.bf16 %v437, 1040203264
        %v446 = vld [vmem:[%s355] sm:$0xf]
        %v447 = vld [vmem:[%s355 + $0x4] sm:$0xf]
        %v448 = vld [vmem:[%s355 + $0x8] sm:$0xf]
        %v449 = vld [vmem:[%s355 + $0xc] sm:$0xf]
        %v450 = vld [vmem:[%s355 + $0x10] sm:$0xf]
        %v451 = vld [vmem:[%s355 + $0x14] sm:$0xf]
        %v452 = vld [vmem:[%s355 + $0x18] sm:$0xf]
        %v453 = vld [vmem:[%s355 + $0x1c] sm:$0xf]
        %v454 = vld [vmem:[%s364] sm:$0xf]
        %v455 = vld [vmem:[%s364 + $0x4] sm:$0xf]
        %v456 = vld [vmem:[%s364 + $0x8] sm:$0xf]
        %v457 = vld [vmem:[%s364 + $0xc] sm:$0xf]
        %v458 = vld [vmem:[%s364 + $0x10] sm:$0xf]
        %v459 = vld [vmem:[%s364 + $0x14] sm:$0xf]
        %v460 = vld [vmem:[%s364 + $0x18] sm:$0xf]
        %v461 = vld [vmem:[%s364 + $0x1c] sm:$0xf]
        %v462 = vld [vmem:[%s373] sm:$0x3]
        %v463 = vld [vmem:[%s373 + $0x2] sm:$0x3]
        %v464 = vld [vmem:[%s373 + $0x4] sm:$0x3]
        %v465 = vld [vmem:[%s373 + $0x6] sm:$0x3]
        %v466 = vld [vmem:[%s373 + $0x8] sm:$0x3]
        %v467 = vld [vmem:[%s373 + $0xa] sm:$0x3]
        %v468 = vld [vmem:[%s373 + $0xc] sm:$0x3]
        %v469 = vld [vmem:[%s373 + $0xe] sm:$0x3]
        %vm470 = vcmask 523264
        %v472 = vsel %vm470, %v438, 0
        %v475 = vsel %vm470, %v446, 0
        %477 = vmatprep.subr.bf16.mxu0 0
        %478 = vmatpush1.bf16.xpose.msra.mxu0 0
        %479 = vmatprep.subr.bf16.mxu0 0
        %480 = vmatpush1.bf16.xpose.msra.mxu0 0
        %481 = vmatprep.subr.bf16.mxu0 0
        %482 = vmatpush1.bf16.xpose.msra.mxu0 0
        %483 = vmatprep.subr.bf16.mxu0 0
        %484 = vmatpush1.bf16.xpose.msra.mxu0 0
        %485 = vmatprep.subr.bf16.mxu0 0
        %486 = vmatpush1.bf16.xpose.msra.mxu0 0
        %487 = vmatprep.subr.bf16.mxu0 0
        %488 = vmatpush1.bf16.xpose.msra.mxu0 0
        %489 = vmatprep.subr.bf16.mxu0 0
        %490 = vmatpush1.bf16.xpose.msra.mxu0 0
        %491 = vmatprep.subr.bf16.mxu0 0
        %492 = vmatpush1.bf16.xpose.msra.mxu0 %v475
        %493 = vmatprep.subr.bf16.mxu0 0
        %494 = vmatpush2.bf16.xpose.msra.mxu0 0
        %495 = vmatprep.subr.bf16.mxu0 0
        %496 = vmatpush2.bf16.xpose.msra.mxu0 0
        %497 = vmatprep.subr.bf16.mxu0 0
        %498 = vmatpush2.bf16.xpose.msra.mxu0 0
        %499 = vmatprep.subr.bf16.mxu0 0
        %500 = vmatpush2.bf16.xpose.msra.mxu0 0
        %501 = vmatprep.subr.bf16.mxu0 0
        %502 = vmatpush2.bf16.xpose.msra.mxu0 0
        %503 = vmatprep.subr.bf16.mxu0 0
        %504 = vmatpush2.bf16.xpose.msra.mxu0 0
        %505 = vmatprep.subr.bf16.mxu0 0
        %506 = vmatpush2.bf16.xpose.msra.mxu0 0
        %507 = vmatprep.subr.bf16.mxu0 0
        %508 = vmatpush2.bf16.xpose.msra.mxu0 0
        %509 = vmatprep.mubr.bf16.mxu0 0
        %510 = vmatmul.mubr.bf16.gmra.mxu0 %v472
        %v511 = vpop.f32.mrf.mxu0
        %v512 = vadd.f32 0.0, %v511
        %v513 = vpop.f32.mrf.mxu0
        %v514 = vpop.f32.mrf.mxu0
        %v515 = vpop.f32.mrf.mxu0
        %516 = vdwg.mxu0
        %v518 = vsel %vm470, %v439, 0
        %v521 = vsel %vm470, %v447, 0
        %523 = vmatprep.subr.bf16.mxu0 0
        %524 = vmatpush1.bf16.xpose.msra.mxu0 0
        %525 = vmatprep.subr.bf16.mxu0 0
        %526 = vmatpush1.bf16.xpose.msra.mxu0 0
        %527 = vmatprep.subr.bf16.mxu0 0
        %528 = vmatpush1.bf16.xpose.msra.mxu0 0
        %529 = vmatprep.subr.bf16.mxu0 0
        %530 = vmatpush1.bf16.xpose.msra.mxu0 0
        %531 = vmatprep.subr.bf16.mxu0 0
        %532 = vmatpush1.bf16.xpose.msra.mxu0 0
        %533 = vmatprep.subr.bf16.mxu0 0
        %534 = vmatpush1.bf16.xpose.msra.mxu0 0
        %535 = vmatprep.subr.bf16.mxu0 0
        %536 = vmatpush1.bf16.xpose.msra.mxu0 0
        %537 = vmatprep.subr.bf16.mxu0 0
        %538 = vmatpush1.bf16.xpose.msra.mxu0 %v521
        %539 = vmatprep.subr.bf16.mxu0 0
        %540 = vmatpush2.bf16.xpose.msra.mxu0 0
        %541 = vmatprep.subr.bf16.mxu0 0
        %542 = vmatpush2.bf16.xpose.msra.mxu0 0
        %543 = vmatprep.subr.bf16.mxu0 0
        %544 = vmatpush2.bf16.xpose.msra.mxu0 0
        %545 = vmatprep.subr.bf16.mxu0 0
        %546 = vmatpush2.bf16.xpose.msra.mxu0 0
        %547 = vmatprep.subr.bf16.mxu0 0
        %548 = vmatpush2.bf16.xpose.msra.mxu0 0
        %549 = vmatprep.subr.bf16.mxu0 0
        %550 = vmatpush2.bf16.xpose.msra.mxu0 0
        %551 = vmatprep.subr.bf16.mxu0 0
        %552 = vmatpush2.bf16.xpose.msra.mxu0 0
        %553 = vmatprep.subr.bf16.mxu0 0
        %554 = vmatpush2.bf16.xpose.msra.mxu0 0
        %555 = vmatprep.mubr.bf16.mxu0 0
        %556 = vmatmul.mubr.bf16.gmra.mxu0 %v518
        %v557 = vpop.f32.mrf.mxu0
        %v558 = vadd.f32 0.0, %v557
        %v559 = vpop.f32.mrf.mxu0
        %v560 = vpop.f32.mrf.mxu0
        %v561 = vpop.f32.mrf.mxu0
        %562 = vdwg.mxu0
        %v564 = vsel %vm470, %v440, 0
        %v567 = vsel %vm470, %v448, 0
        %569 = vmatprep.subr.bf16.mxu0 0
        %570 = vmatpush1.bf16.xpose.msra.mxu0 0
        %571 = vmatprep.subr.bf16.mxu0 0
        %572 = vmatpush1.bf16.xpose.msra.mxu0 0
        %573 = vmatprep.subr.bf16.mxu0 0
        %574 = vmatpush1.bf16.xpose.msra.mxu0 0
        %575 = vmatprep.subr.bf16.mxu0 0
        %576 = vmatpush1.bf16.xpose.msra.mxu0 0
        %577 = vmatprep.subr.bf16.mxu0 0
        %578 = vmatpush1.bf16.xpose.msra.mxu0 0
        %579 = vmatprep.subr.bf16.mxu0 0
        %580 = vmatpush1.bf16.xpose.msra.mxu0 0
        %581 = vmatprep.subr.bf16.mxu0 0
        %582 = vmatpush1.bf16.xpose.msra.mxu0 0
        %583 = vmatprep.subr.bf16.mxu0 0
        %584 = vmatpush1.bf16.xpose.msra.mxu0 %v567
        %585 = vmatprep.subr.bf16.mxu0 0
        %586 = vmatpush2.bf16.xpose.msra.mxu0 0
        %587 = vmatprep.subr.bf16.mxu0 0
        %588 = vmatpush2.bf16.xpose.msra.mxu0 0
        %589 = vmatprep.subr.bf16.mxu0 0
        %590 = vmatpush2.bf16.xpose.msra.mxu0 0
        %591 = vmatprep.subr.bf16.mxu0 0
        %592 = vmatpush2.bf16.xpose.msra.mxu0 0
        %593 = vmatprep.subr.bf16.mxu0 0
        %594 = vmatpush2.bf16.xpose.msra.mxu0 0
        %595 = vmatprep.subr.bf16.mxu0 0
        %596 = vmatpush2.bf16.xpose.msra.mxu0 0
        %597 = vmatprep.subr.bf16.mxu0 0
        %598 = vmatpush2.bf16.xpose.msra.mxu0 0
        %599 = vmatprep.subr.bf16.mxu0 0
        %600 = vmatpush2.bf16.xpose.msra.mxu0 0
        %601 = vmatprep.mubr.bf16.mxu0 0
        %602 = vmatmul.mubr.bf16.gmra.mxu0 %v564
        %v603 = vpop.f32.mrf.mxu0
        %v604 = vadd.f32 0.0, %v603
        %v605 = vpop.f32.mrf.mxu0
        %v606 = vpop.f32.mrf.mxu0
        %v607 = vpop.f32.mrf.mxu0
        %608 = vdwg.mxu0
        %v610 = vsel %vm470, %v441, 0
        %v613 = vsel %vm470, %v449, 0
        %615 = vmatprep.subr.bf16.mxu0 0
        %616 = vmatpush1.bf16.xpose.msra.mxu0 0
        %617 = vmatprep.subr.bf16.mxu0 0
        %618 = vmatpush1.bf16.xpose.msra.mxu0 0
        %619 = vmatprep.subr.bf16.mxu0 0
        %620 = vmatpush1.bf16.xpose.msra.mxu0 0
        %621 = vmatprep.subr.bf16.mxu0 0
        %622 = vmatpush1.bf16.xpose.msra.mxu0 0
        %623 = vmatprep.subr.bf16.mxu0 0
        %624 = vmatpush1.bf16.xpose.msra.mxu0 0
        %625 = vmatprep.subr.bf16.mxu0 0
        %626 = vmatpush1.bf16.xpose.msra.mxu0 0
        %627 = vmatprep.subr.bf16.mxu0 0
        %628 = vmatpush1.bf16.xpose.msra.mxu0 0
        %629 = vmatprep.subr.bf16.mxu0 0
        %630 = vmatpush1.bf16.xpose.msra.mxu0 %v613
        %631 = vmatprep.subr.bf16.mxu0 0
        %632 = vmatpush2.bf16.xpose.msra.mxu0 0
        %633 = vmatprep.subr.bf16.mxu0 0
        %634 = vmatpush2.bf16.xpose.msra.mxu0 0
        %635 = vmatprep.subr.bf16.mxu0 0
        %636 = vmatpush2.bf16.xpose.msra.mxu0 0
        %637 = vmatprep.subr.bf16.mxu0 0
        %638 = vmatpush2.bf16.xpose.msra.mxu0 0
        %639 = vmatprep.subr.bf16.mxu0 0
        %640 = vmatpush2.bf16.xpose.msra.mxu0 0
        %641 = vmatprep.subr.bf16.mxu0 0
        %642 = vmatpush2.bf16.xpose.msra.mxu0 0
        %643 = vmatprep.subr.bf16.mxu0 0
        %644 = vmatpush2.bf16.xpose.msra.mxu0 0
        %645 = vmatprep.subr.bf16.mxu0 0
        %646 = vmatpush2.bf16.xpose.msra.mxu0 0
        %647 = vmatprep.mubr.bf16.mxu0 0
        %648 = vmatmul.mubr.bf16.gmra.mxu0 %v610
        %v649 = vpop.f32.mrf.mxu0
        %v650 = vadd.f32 0.0, %v649
        %v651 = vpop.f32.mrf.mxu0
        %v652 = vpop.f32.mrf.mxu0
        %v653 = vpop.f32.mrf.mxu0
        %654 = vdwg.mxu0
        %v656 = vsel %vm470, %v442, 0
        %v659 = vsel %vm470, %v450, 0
        %661 = vmatprep.subr.bf16.mxu0 0
        %662 = vmatpush1.bf16.xpose.msra.mxu0 0
        %663 = vmatprep.subr.bf16.mxu0 0
        %664 = vmatpush1.bf16.xpose.msra.mxu0 0
        %665 = vmatprep.subr.bf16.mxu0 0
        %666 = vmatpush1.bf16.xpose.msra.mxu0 0
        %667 = vmatprep.subr.bf16.mxu0 0
        %668 = vmatpush1.bf16.xpose.msra.mxu0 0
        %669 = vmatprep.subr.bf16.mxu0 0
        %670 = vmatpush1.bf16.xpose.msra.mxu0 0
        %671 = vmatprep.subr.bf16.mxu0 0
        %672 = vmatpush1.bf16.xpose.msra.mxu0 0
        %673 = vmatprep.subr.bf16.mxu0 0
        %674 = vmatpush1.bf16.xpose.msra.mxu0 0
        %675 = vmatprep.subr.bf16.mxu0 0
        %676 = vmatpush1.bf16.xpose.msra.mxu0 %v659
        %677 = vmatprep.subr.bf16.mxu0 0
        %678 = vmatpush2.bf16.xpose.msra.mxu0 0
        %679 = vmatprep.subr.bf16.mxu0 0
        %680 = vmatpush2.bf16.xpose.msra.mxu0 0
        %681 = vmatprep.subr.bf16.mxu0 0
        %682 = vmatpush2.bf16.xpose.msra.mxu0 0
        %683 = vmatprep.subr.bf16.mxu0 0
        %684 = vmatpush2.bf16.xpose.msra.mxu0 0
        %685 = vmatprep.subr.bf16.mxu0 0
        %686 = vmatpush2.bf16.xpose.msra.mxu0 0
        %687 = vmatprep.subr.bf16.mxu0 0
        %688 = vmatpush2.bf16.xpose.msra.mxu0 0
        %689 = vmatprep.subr.bf16.mxu0 0
        %690 = vmatpush2.bf16.xpose.msra.mxu0 0
        %691 = vmatprep.subr.bf16.mxu0 0
        %692 = vmatpush2.bf16.xpose.msra.mxu0 0
        %693 = vmatprep.mubr.bf16.mxu0 0
        %694 = vmatmul.mubr.bf16.gmra.mxu0 %v656
        %v695 = vpop.f32.mrf.mxu0
        %v696 = vadd.f32 0.0, %v695
        %v697 = vpop.f32.mrf.mxu0
        %v698 = vpop.f32.mrf.mxu0
        %v699 = vpop.f32.mrf.mxu0
        %700 = vdwg.mxu0
        %v702 = vsel %vm470, %v443, 0
        %v705 = vsel %vm470, %v451, 0
        %707 = vmatprep.subr.bf16.mxu0 0
        %708 = vmatpush1.bf16.xpose.msra.mxu0 0
        %709 = vmatprep.subr.bf16.mxu0 0
        %710 = vmatpush1.bf16.xpose.msra.mxu0 0
        %711 = vmatprep.subr.bf16.mxu0 0
        %712 = vmatpush1.bf16.xpose.msra.mxu0 0
        %713 = vmatprep.subr.bf16.mxu0 0
        %714 = vmatpush1.bf16.xpose.msra.mxu0 0
        %715 = vmatprep.subr.bf16.mxu0 0
        %716 = vmatpush1.bf16.xpose.msra.mxu0 0
        %717 = vmatprep.subr.bf16.mxu0 0
        %718 = vmatpush1.bf16.xpose.msra.mxu0 0
        %719 = vmatprep.subr.bf16.mxu0 0
        %720 = vmatpush1.bf16.xpose.msra.mxu0 0
        %721 = vmatprep.subr.bf16.mxu0 0
        %722 = vmatpush1.bf16.xpose.msra.mxu0 %v705
        %723 = vmatprep.subr.bf16.mxu0 0
        %724 = vmatpush2.bf16.xpose.msra.mxu0 0
        %725 = vmatprep.subr.bf16.mxu0 0
        %726 = vmatpush2.bf16.xpose.msra.mxu0 0
        %727 = vmatprep.subr.bf16.mxu0 0
        %728 = vmatpush2.bf16.xpose.msra.mxu0 0
        %729 = vmatprep.subr.bf16.mxu0 0
        %730 = vmatpush2.bf16.xpose.msra.mxu0 0
        %731 = vmatprep.subr.bf16.mxu0 0
        %732 = vmatpush2.bf16.xpose.msra.mxu0 0
        %733 = vmatprep.subr.bf16.mxu0 0
        %734 = vmatpush2.bf16.xpose.msra.mxu0 0
        %735 = vmatprep.subr.bf16.mxu0 0
        %736 = vmatpush2.bf16.xpose.msra.mxu0 0
        %737 = vmatprep.subr.bf16.mxu0 0
        %738 = vmatpush2.bf16.xpose.msra.mxu0 0
        %739 = vmatprep.mubr.bf16.mxu0 0
        %740 = vmatmul.mubr.bf16.gmra.mxu0 %v702
        %v741 = vpop.f32.mrf.mxu0
        %v742 = vadd.f32 0.0, %v741
        %v743 = vpop.f32.mrf.mxu0
        %v744 = vpop.f32.mrf.mxu0
        %v745 = vpop.f32.mrf.mxu0
        %746 = vdwg.mxu0
        %v748 = vsel %vm470, %v444, 0
        %v751 = vsel %vm470, %v452, 0
        %753 = vmatprep.subr.bf16.mxu0 0
        %754 = vmatpush1.bf16.xpose.msra.mxu0 0
        %755 = vmatprep.subr.bf16.mxu0 0
        %756 = vmatpush1.bf16.xpose.msra.mxu0 0
        %757 = vmatprep.subr.bf16.mxu0 0
        %758 = vmatpush1.bf16.xpose.msra.mxu0 0
        %759 = vmatprep.subr.bf16.mxu0 0
        %760 = vmatpush1.bf16.xpose.msra.mxu0 0
        %761 = vmatprep.subr.bf16.mxu0 0
        %762 = vmatpush1.bf16.xpose.msra.mxu0 0
        %763 = vmatprep.subr.bf16.mxu0 0
        %764 = vmatpush1.bf16.xpose.msra.mxu0 0
        %765 = vmatprep.subr.bf16.mxu0 0
        %766 = vmatpush1.bf16.xpose.msra.mxu0 0
        %767 = vmatprep.subr.bf16.mxu0 0
        %768 = vmatpush1.bf16.xpose.msra.mxu0 %v751
        %769 = vmatprep.subr.bf16.mxu0 0
        %770 = vmatpush2.bf16.xpose.msra.mxu0 0
        %771 = vmatprep.subr.bf16.mxu0 0
        %772 = vmatpush2.bf16.xpose.msra.mxu0 0
        %773 = vmatprep.subr.bf16.mxu0 0
        %774 = vmatpush2.bf16.xpose.msra.mxu0 0
        %775 = vmatprep.subr.bf16.mxu0 0
        %776 = vmatpush2.bf16.xpose.msra.mxu0 0
        %777 = vmatprep.subr.bf16.mxu0 0
        %778 = vmatpush2.bf16.xpose.msra.mxu0 0
        %779 = vmatprep.subr.bf16.mxu0 0
        %780 = vmatpush2.bf16.xpose.msra.mxu0 0
        %781 = vmatprep.subr.bf16.mxu0 0
        %782 = vmatpush2.bf16.xpose.msra.mxu0 0
        %783 = vmatprep.subr.bf16.mxu0 0
        %784 = vmatpush2.bf16.xpose.msra.mxu0 0
        %785 = vmatprep.mubr.bf16.mxu0 0
        %786 = vmatmul.mubr.bf16.gmra.mxu0 %v748
        %v787 = vpop.f32.mrf.mxu0
        %v788 = vadd.f32 0.0, %v787
        %v789 = vpop.f32.mrf.mxu0
        %v790 = vpop.f32.mrf.mxu0
        %v791 = vpop.f32.mrf.mxu0
        %792 = vdwg.mxu0
        %v794 = vsel %vm470, %v445, 0
        %v797 = vsel %vm470, %v453, 0
        %799 = vmatprep.subr.bf16.mxu0 0
        %800 = vmatpush1.bf16.xpose.msra.mxu0 0
        %801 = vmatprep.subr.bf16.mxu0 0
        %802 = vmatpush1.bf16.xpose.msra.mxu0 0
        %803 = vmatprep.subr.bf16.mxu0 0
        %804 = vmatpush1.bf16.xpose.msra.mxu0 0
        %805 = vmatprep.subr.bf16.mxu0 0
        %806 = vmatpush1.bf16.xpose.msra.mxu0 0
        %807 = vmatprep.subr.bf16.mxu0 0
        %808 = vmatpush1.bf16.xpose.msra.mxu0 0
        %809 = vmatprep.subr.bf16.mxu0 0
        %810 = vmatpush1.bf16.xpose.msra.mxu0 0
        %811 = vmatprep.subr.bf16.mxu0 0
        %812 = vmatpush1.bf16.xpose.msra.mxu0 0
        %813 = vmatprep.subr.bf16.mxu0 0
        %814 = vmatpush1.bf16.xpose.msra.mxu0 %v797
        %815 = vmatprep.subr.bf16.mxu0 0
        %816 = vmatpush2.bf16.xpose.msra.mxu0 0
        %817 = vmatprep.subr.bf16.mxu0 0
        %818 = vmatpush2.bf16.xpose.msra.mxu0 0
        %819 = vmatprep.subr.bf16.mxu0 0
        %820 = vmatpush2.bf16.xpose.msra.mxu0 0
        %821 = vmatprep.subr.bf16.mxu0 0
        %822 = vmatpush2.bf16.xpose.msra.mxu0 0
        %823 = vmatprep.subr.bf16.mxu0 0
        %824 = vmatpush2.bf16.xpose.msra.mxu0 0
        %825 = vmatprep.subr.bf16.mxu0 0
        %826 = vmatpush2.bf16.xpose.msra.mxu0 0
        %827 = vmatprep.subr.bf16.mxu0 0
        %828 = vmatpush2.bf16.xpose.msra.mxu0 0
        %829 = vmatprep.subr.bf16.mxu0 0
        %830 = vmatpush2.bf16.xpose.msra.mxu0 0
        %831 = vmatprep.mubr.bf16.mxu0 0
        %832 = vmatmul.mubr.bf16.gmra.mxu0 %v794
        %v833 = vpop.f32.mrf.mxu0
        %v834 = vadd.f32 0.0, %v833
        %v835 = vpop.f32.mrf.mxu0
        %v836 = vpop.f32.mrf.mxu0
        %v837 = vpop.f32.mrf.mxu0
        %838 = vdwg.mxu0
        %vm839 = vnez %v462
        %vm840 = vnez %v463
        %vm841 = vnez %v464
        %vm842 = vnez %v465
        %vm843 = vnez %v466
        %vm844 = vnez %v467
        %vm845 = vnez %v468
        %vm846 = vnez %v469
        %v847 = vsel %vm839, 16843009, 0
        %v848 = vsel %vm840, 16843009, 0
        %v849 = vsel %vm841, 16843009, 0
        %v850 = vsel %vm842, 16843009, 0
        %v851 = vsel %vm843, 16843009, 0
        %v852 = vsel %vm844, 16843009, 0
        %v853 = vsel %vm845, 16843009, 0
        %v854 = vsel %vm846, 16843009, 0
        %v855 = vunpack.c.0.s8 %v847
        %v856 = vunpack.c.0.s8 %v848
        %v857 = vunpack.c.0.s8 %v849
        %v858 = vunpack.c.0.s8 %v850
        %v859 = vunpack.c.0.s8 %v851
        %v860 = vunpack.c.0.s8 %v852
        %v861 = vunpack.c.0.s8 %v853
        %v862 = vunpack.c.0.s8 %v854
        %vm863 = vcmp.ne.s32.totalorder %v855, 0
        %vm864 = vcmp.ne.s32.totalorder %v856, 0
        %vm865 = vcmp.ne.s32.totalorder %v857, 0
        %vm866 = vcmp.ne.s32.totalorder %v858, 0
        %vm867 = vcmp.ne.s32.totalorder %v859, 0
        %vm868 = vcmp.ne.s32.totalorder %v860, 0
        %vm869 = vcmp.ne.s32.totalorder %v861, 0
        %vm870 = vcmp.ne.s32.totalorder %v862, 0
        %v871 = vsel %vm863, -1e+09, %v512
        %v872 = vsel %vm864, -1e+09, %v558
        %v873 = vsel %vm865, -1e+09, %v604
        %v874 = vsel %vm866, -1e+09, %v650
        %v875 = vsel %vm867, -1e+09, %v696
        %v876 = vsel %vm868, -1e+09, %v742
        %v877 = vsel %vm869, -1e+09, %v788
        %v878 = vsel %vm870, -1e+09, %v834
        %vm879 = vcmask 64512
        %v880 = vsel %vm879, %v871, -inf
        %881 = vmax.xlane.f32.xlu0 %v880
        %v882 = vpop.xlane.xlu0 %881
        %v883 = vsel %vm879, %v872, -inf
        %884 = vmax.xlane.f32.xlu0 %v883
        %v885 = vpop.xlane.xlu0 %884
        %v886 = vsel %vm879, %v873, -inf
        %887 = vmax.xlane.f32.xlu0 %v886
        %v888 = vpop.xlane.xlu0 %887
        %v889 = vsel %vm879, %v874, -inf
        %890 = vmax.xlane.f32.xlu0 %v889
        %v891 = vpop.xlane.xlu0 %890
        %v892 = vsel %vm879, %v875, -inf
        %893 = vmax.xlane.f32.xlu0 %v892
        %v894 = vpop.xlane.xlu0 %893
        %v895 = vsel %vm879, %v876, -inf
        %896 = vmax.xlane.f32.xlu0 %v895
        %v897 = vpop.xlane.xlu0 %896
        %v898 = vsel %vm879, %v877, -inf
        %899 = vmax.xlane.f32.xlu0 %v898
        %v900 = vpop.xlane.xlu0 %899
        %v901 = vsel %vm879, %v878, -inf
        %902 = vmax.xlane.f32.xlu0 %v901
        %v903 = vpop.xlane.xlu0 %902
        %v904 = vsub.f32 %v871, %v882
        %v905 = vsub.f32 %v872, %v885
        %v906 = vsub.f32 %v873, %v888
        %v907 = vsub.f32 %v874, %v891
        %v908 = vsub.f32 %v875, %v894
        %v909 = vsub.f32 %v876, %v897
        %v910 = vsub.f32 %v877, %v900
        %v911 = vsub.f32 %v878, %v903
        %v912 = vmul.f32 %v904, 1.442695
        %v913 = vpow.pop %v912
        %v914 = vmul.f32 %v905, 1.442695
        %v915 = vpow.pop %v914
        %v916 = vmul.f32 %v906, 1.442695
        %v917 = vpow.pop %v916
        %v918 = vmul.f32 %v907, 1.442695
        %v919 = vpow.pop %v918
        %v920 = vmul.f32 %v908, 1.442695
        %v921 = vpow.pop %v920
        %v922 = vmul.f32 %v909, 1.442695
        %v923 = vpow.pop %v922
        %v924 = vmul.f32 %v910, 1.442695
        %v925 = vpow.pop %v924
        %v926 = vmul.f32 %v911, 1.442695
        %v927 = vpow.pop %v926
        %v928 = vsel %vm879, %v913, 0.0
        %929 = vadd.xlane.f32.xlu0 %v928
        %v930 = vpop.xlane.xlu0 %929
        %v931 = vsel %vm879, %v915, 0.0
        %932 = vadd.xlane.f32.xlu0 %v931
        %v933 = vpop.xlane.xlu0 %932
        %v934 = vsel %vm879, %v917, 0.0
        %935 = vadd.xlane.f32.xlu0 %v934
        %v936 = vpop.xlane.xlu0 %935
        %v937 = vsel %vm879, %v919, 0.0
        %938 = vadd.xlane.f32.xlu0 %v937
        %v939 = vpop.xlane.xlu0 %938
        %v940 = vsel %vm879, %v921, 0.0
        %941 = vadd.xlane.f32.xlu0 %v940
        %v942 = vpop.xlane.xlu0 %941
        %v943 = vsel %vm879, %v923, 0.0
        %944 = vadd.xlane.f32.xlu0 %v943
        %v945 = vpop.xlane.xlu0 %944
        %v946 = vsel %vm879, %v925, 0.0
        %947 = vadd.xlane.f32.xlu0 %v946
        %v948 = vpop.xlane.xlu0 %947
        %v949 = vsel %vm879, %v927, 0.0
        %950 = vadd.xlane.f32.xlu0 %v949
        %v951 = vpop.xlane.xlu0 %950
        %v952 = vrcp.pop %v930
        %v953 = vmul.f32 1.0, %v952
        %v954 = vrcp.pop %v933
        %v955 = vmul.f32 1.0, %v954
        %v956 = vrcp.pop %v936
        %v957 = vmul.f32 1.0, %v956
        %v958 = vrcp.pop %v939
        %v959 = vmul.f32 1.0, %v958
        %v960 = vrcp.pop %v942
        %v961 = vmul.f32 1.0, %v960
        %v962 = vrcp.pop %v945
        %v963 = vmul.f32 1.0, %v962
        %v964 = vrcp.pop %v948
        %v965 = vmul.f32 1.0, %v964
        %v966 = vrcp.pop %v951
        %v967 = vmul.f32 1.0, %v966
        %v968 = vmul.f32 %v913, %v953
        %v969 = vmul.f32 %v915, %v955
        %v970 = vmul.f32 %v917, %v957
        %v971 = vmul.f32 %v919, %v959
        %v972 = vmul.f32 %v921, %v961
        %v973 = vmul.f32 %v923, %v963
        %v974 = vmul.f32 %v925, %v965
        %v975 = vmul.f32 %v927, %v967
        %v976 = vpack.c.bf16 %v968, %v968
        %v977 = vpack.c.bf16 %v969, %v969
        %v978 = vpack.c.bf16 %v970, %v970
        %v979 = vpack.c.bf16 %v971, %v971
        %v980 = vpack.c.bf16 %v972, %v972
        %v981 = vpack.c.bf16 %v973, %v973
        %v982 = vpack.c.bf16 %v974, %v974
        %v983 = vpack.c.bf16 %v975, %v975
        %v985 = vsel %vm879, %v976, 0
        %vm987 = vcmask 1043456
        %v989 = vsel %vm987, %v454, 0
        %991 = vmatprep.subr.bf16.mxu0 0
        %992 = vmatpush1.bf16.msra.mxu0 0
        %993 = vmatprep.subr.bf16.mxu0 0
        %994 = vmatpush1.bf16.msra.mxu0 0
        %995 = vmatprep.subr.bf16.mxu0 0
        %996 = vmatpush1.bf16.msra.mxu0 0
        %997 = vmatprep.subr.bf16.mxu0 0
        %998 = vmatpush1.bf16.msra.mxu0 0
        %999 = vmatprep.subr.bf16.mxu0 0
        %1000 = vmatpush1.bf16.msra.mxu0 0
        %1001 = vmatprep.subr.bf16.mxu0 0
        %1002 = vmatpush1.bf16.msra.mxu0 0
        %1003 = vmatprep.subr.bf16.mxu0 0
        %1004 = vmatpush1.bf16.msra.mxu0 0
        %1005 = vmatprep.subr.bf16.mxu0 0
        %1006 = vmatpush1.bf16.msra.mxu0 %v989
        %1007 = vmatprep.subr.bf16.mxu0 0
        %1008 = vmatpush2.bf16.msra.mxu0 0
        %1009 = vmatprep.subr.bf16.mxu0 0
        %1010 = vmatpush2.bf16.msra.mxu0 0
        %1011 = vmatprep.subr.bf16.mxu0 0
        %1012 = vmatpush2.bf16.msra.mxu0 0
        %1013 = vmatprep.subr.bf16.mxu0 0
        %1014 = vmatpush2.bf16.msra.mxu0 0
        %1015 = vmatprep.subr.bf16.mxu0 0
        %1016 = vmatpush2.bf16.msra.mxu0 0
        %1017 = vmatprep.subr.bf16.mxu0 0
        %1018 = vmatpush2.bf16.msra.mxu0 0
        %1019 = vmatprep.subr.bf16.mxu0 0
        %1020 = vmatpush2.bf16.msra.mxu0 0
        %1021 = vmatprep.subr.bf16.mxu0 0
        %1022 = vmatpush2.bf16.msra.mxu0 0
        %1023 = vmatprep.mubr.bf16.mxu0 0
        %1024 = vmatmul.mubr.bf16.gmra.mxu0 %v985
        %v1025 = vpop.f32.mrf.mxu0
        %v1026 = vadd.f32 0.0, %v1025
        %v1027 = vpop.f32.mrf.mxu0
        %v1028 = vpop.f32.mrf.mxu0
        %v1029 = vpop.f32.mrf.mxu0
        %1030 = vdwg.mxu0
        %v1032 = vsel %vm879, %v977, 0
        %v1035 = vsel %vm987, %v455, 0
        %1037 = vmatprep.subr.bf16.mxu0 0
        %1038 = vmatpush1.bf16.msra.mxu0 0
        %1039 = vmatprep.subr.bf16.mxu0 0
        %1040 = vmatpush1.bf16.msra.mxu0 0
        %1041 = vmatprep.subr.bf16.mxu0 0
        %1042 = vmatpush1.bf16.msra.mxu0 0
        %1043 = vmatprep.subr.bf16.mxu0 0
        %1044 = vmatpush1.bf16.msra.mxu0 0
        %1045 = vmatprep.subr.bf16.mxu0 0
        %1046 = vmatpush1.bf16.msra.mxu0 0
        %1047 = vmatprep.subr.bf16.mxu0 0
        %1048 = vmatpush1.bf16.msra.mxu0 0
        %1049 = vmatprep.subr.bf16.mxu0 0
        %1050 = vmatpush1.bf16.msra.mxu0 0
        %1051 = vmatprep.subr.bf16.mxu0 0
        %1052 = vmatpush1.bf16.msra.mxu0 %v1035
        %1053 = vmatprep.subr.bf16.mxu0 0
        %1054 = vmatpush2.bf16.msra.mxu0 0
        %1055 = vmatprep.subr.bf16.mxu0 0
        %1056 = vmatpush2.bf16.msra.mxu0 0
        %1057 = vmatprep.subr.bf16.mxu0 0
        %1058 = vmatpush2.bf16.msra.mxu0 0
        %1059 = vmatprep.subr.bf16.mxu0 0
        %1060 = vmatpush2.bf16.msra.mxu0 0
        %1061 = vmatprep.subr.bf16.mxu0 0
        %1062 = vmatpush2.bf16.msra.mxu0 0
        %1063 = vmatprep.subr.bf16.mxu0 0
        %1064 = vmatpush2.bf16.msra.mxu0 0
        %1065 = vmatprep.subr.bf16.mxu0 0
        %1066 = vmatpush2.bf16.msra.mxu0 0
        %1067 = vmatprep.subr.bf16.mxu0 0
        %1068 = vmatpush2.bf16.msra.mxu0 0
        %1069 = vmatprep.mubr.bf16.mxu0 0
        %1070 = vmatmul.mubr.bf16.gmra.mxu0 %v1032
        %v1071 = vpop.f32.mrf.mxu0
        %v1072 = vadd.f32 0.0, %v1071
        %v1073 = vpop.f32.mrf.mxu0
        %v1074 = vpop.f32.mrf.mxu0
        %v1075 = vpop.f32.mrf.mxu0
        %1076 = vdwg.mxu0
        %v1078 = vsel %vm879, %v978, 0
        %v1081 = vsel %vm987, %v456, 0
        %1083 = vmatprep.subr.bf16.mxu0 0
        %1084 = vmatpush1.bf16.msra.mxu0 0
        %1085 = vmatprep.subr.bf16.mxu0 0
        %1086 = vmatpush1.bf16.msra.mxu0 0
        %1087 = vmatprep.subr.bf16.mxu0 0
        %1088 = vmatpush1.bf16.msra.mxu0 0
        %1089 = vmatprep.subr.bf16.mxu0 0
        %1090 = vmatpush1.bf16.msra.mxu0 0
        %1091 = vmatprep.subr.bf16.mxu0 0
        %1092 = vmatpush1.bf16.msra.mxu0 0
        %1093 = vmatprep.subr.bf16.mxu0 0
        %1094 = vmatpush1.bf16.msra.mxu0 0
        %1095 = vmatprep.subr.bf16.mxu0 0
        %1096 = vmatpush1.bf16.msra.mxu0 0
        %1097 = vmatprep.subr.bf16.mxu0 0
        %1098 = vmatpush1.bf16.msra.mxu0 %v1081
        %1099 = vmatprep.subr.bf16.mxu0 0
        %1100 = vmatpush2.bf16.msra.mxu0 0
        %1101 = vmatprep.subr.bf16.mxu0 0
        %1102 = vmatpush2.bf16.msra.mxu0 0
        %1103 = vmatprep.subr.bf16.mxu0 0
        %1104 = vmatpush2.bf16.msra.mxu0 0
        %1105 = vmatprep.subr.bf16.mxu0 0
        %1106 = vmatpush2.bf16.msra.mxu0 0
        %1107 = vmatprep.subr.bf16.mxu0 0
        %1108 = vmatpush2.bf16.msra.mxu0 0
        %1109 = vmatprep.subr.bf16.mxu0 0
        %1110 = vmatpush2.bf16.msra.mxu0 0
        %1111 = vmatprep.subr.bf16.mxu0 0
        %1112 = vmatpush2.bf16.msra.mxu0 0
        %1113 = vmatprep.subr.bf16.mxu0 0
        %1114 = vmatpush2.bf16.msra.mxu0 0
        %1115 = vmatprep.mubr.bf16.mxu0 0
        %1116 = vmatmul.mubr.bf16.gmra.mxu0 %v1078
        %v1117 = vpop.f32.mrf.mxu0
        %v1118 = vadd.f32 0.0, %v1117
        %v1119 = vpop.f32.mrf.mxu0
        %v1120 = vpop.f32.mrf.mxu0
        %v1121 = vpop.f32.mrf.mxu0
        %1122 = vdwg.mxu0
        %v1124 = vsel %vm879, %v979, 0
        %v1127 = vsel %vm987, %v457, 0
        %1129 = vmatprep.subr.bf16.mxu0 0
        %1130 = vmatpush1.bf16.msra.mxu0 0
        %1131 = vmatprep.subr.bf16.mxu0 0
        %1132 = vmatpush1.bf16.msra.mxu0 0
        %1133 = vmatprep.subr.bf16.mxu0 0
        %1134 = vmatpush1.bf16.msra.mxu0 0
        %1135 = vmatprep.subr.bf16.mxu0 0
        %1136 = vmatpush1.bf16.msra.mxu0 0
        %1137 = vmatprep.subr.bf16.mxu0 0
        %1138 = vmatpush1.bf16.msra.mxu0 0
        %1139 = vmatprep.subr.bf16.mxu0 0
        %1140 = vmatpush1.bf16.msra.mxu0 0
        %1141 = vmatprep.subr.bf16.mxu0 0
        %1142 = vmatpush1.bf16.msra.mxu0 0
        %1143 = vmatprep.subr.bf16.mxu0 0
        %1144 = vmatpush1.bf16.msra.mxu0 %v1127
        %1145 = vmatprep.subr.bf16.mxu0 0
        %1146 = vmatpush2.bf16.msra.mxu0 0
        %1147 = vmatprep.subr.bf16.mxu0 0
        %1148 = vmatpush2.bf16.msra.mxu0 0
        %1149 = vmatprep.subr.bf16.mxu0 0
        %1150 = vmatpush2.bf16.msra.mxu0 0
        %1151 = vmatprep.subr.bf16.mxu0 0
        %1152 = vmatpush2.bf16.msra.mxu0 0
        %1153 = vmatprep.subr.bf16.mxu0 0
        %1154 = vmatpush2.bf16.msra.mxu0 0
        %1155 = vmatprep.subr.bf16.mxu0 0
        %1156 = vmatpush2.bf16.msra.mxu0 0
        %1157 = vmatprep.subr.bf16.mxu0 0
        %1158 = vmatpush2.bf16.msra.mxu0 0
        %1159 = vmatprep.subr.bf16.mxu0 0
        %1160 = vmatpush2.bf16.msra.mxu0 0
        %1161 = vmatprep.mubr.bf16.mxu0 0
        %1162 = vmatmul.mubr.bf16.gmra.mxu0 %v1124
        %v1163 = vpop.f32.mrf.mxu0
        %v1164 = vadd.f32 0.0, %v1163
        %v1165 = vpop.f32.mrf.mxu0
        %v1166 = vpop.f32.mrf.mxu0
        %v1167 = vpop.f32.mrf.mxu0
        %1168 = vdwg.mxu0
        %v1170 = vsel %vm879, %v980, 0
        %v1173 = vsel %vm987, %v458, 0
        %1175 = vmatprep.subr.bf16.mxu0 0
        %1176 = vmatpush1.bf16.msra.mxu0 0
        %1177 = vmatprep.subr.bf16.mxu0 0
        %1178 = vmatpush1.bf16.msra.mxu0 0
        %1179 = vmatprep.subr.bf16.mxu0 0
        %1180 = vmatpush1.bf16.msra.mxu0 0
        %1181 = vmatprep.subr.bf16.mxu0 0
        %1182 = vmatpush1.bf16.msra.mxu0 0
        %1183 = vmatprep.subr.bf16.mxu0 0
        %1184 = vmatpush1.bf16.msra.mxu0 0
        %1185 = vmatprep.subr.bf16.mxu0 0
        %1186 = vmatpush1.bf16.msra.mxu0 0
        %1187 = vmatprep.subr.bf16.mxu0 0
        %1188 = vmatpush1.bf16.msra.mxu0 0
        %1189 = vmatprep.subr.bf16.mxu0 0
        %1190 = vmatpush1.bf16.msra.mxu0 %v1173
        %1191 = vmatprep.subr.bf16.mxu0 0
        %1192 = vmatpush2.bf16.msra.mxu0 0
        %1193 = vmatprep.subr.bf16.mxu0 0
        %1194 = vmatpush2.bf16.msra.mxu0 0
        %1195 = vmatprep.subr.bf16.mxu0 0
        %1196 = vmatpush2.bf16.msra.mxu0 0
        %1197 = vmatprep.subr.bf16.mxu0 0
        %1198 = vmatpush2.bf16.msra.mxu0 0
        %1199 = vmatprep.subr.bf16.mxu0 0
        %1200 = vmatpush2.bf16.msra.mxu0 0
        %1201 = vmatprep.subr.bf16.mxu0 0
        %1202 = vmatpush2.bf16.msra.mxu0 0
        %1203 = vmatprep.subr.bf16.mxu0 0
        %1204 = vmatpush2.bf16.msra.mxu0 0
        %1205 = vmatprep.subr.bf16.mxu0 0
        %1206 = vmatpush2.bf16.msra.mxu0 0
        %1207 = vmatprep.mubr.bf16.mxu0 0
        %1208 = vmatmul.mubr.bf16.gmra.mxu0 %v1170
        %v1209 = vpop.f32.mrf.mxu0
        %v1210 = vadd.f32 0.0, %v1209
        %v1211 = vpop.f32.mrf.mxu0
        %v1212 = vpop.f32.mrf.mxu0
        %v1213 = vpop.f32.mrf.mxu0
        %1214 = vdwg.mxu0
        %v1216 = vsel %vm879, %v981, 0
        %v1219 = vsel %vm987, %v459, 0
        %1221 = vmatprep.subr.bf16.mxu0 0
        %1222 = vmatpush1.bf16.msra.mxu0 0
        %1223 = vmatprep.subr.bf16.mxu0 0
        %1224 = vmatpush1.bf16.msra.mxu0 0
        %1225 = vmatprep.subr.bf16.mxu0 0
        %1226 = vmatpush1.bf16.msra.mxu0 0
        %1227 = vmatprep.subr.bf16.mxu0 0
        %1228 = vmatpush1.bf16.msra.mxu0 0
        %1229 = vmatprep.subr.bf16.mxu0 0
        %1230 = vmatpush1.bf16.msra.mxu0 0
        %1231 = vmatprep.subr.bf16.mxu0 0
        %1232 = vmatpush1.bf16.msra.mxu0 0
        %1233 = vmatprep.subr.bf16.mxu0 0
        %1234 = vmatpush1.bf16.msra.mxu0 0
        %1235 = vmatprep.subr.bf16.mxu0 0
        %1236 = vmatpush1.bf16.msra.mxu0 %v1219
        %1237 = vmatprep.subr.bf16.mxu0 0
        %1238 = vmatpush2.bf16.msra.mxu0 0
        %1239 = vmatprep.subr.bf16.mxu0 0
        %1240 = vmatpush2.bf16.msra.mxu0 0
        %1241 = vmatprep.subr.bf16.mxu0 0
        %1242 = vmatpush2.bf16.msra.mxu0 0
        %1243 = vmatprep.subr.bf16.mxu0 0
        %1244 = vmatpush2.bf16.msra.mxu0 0
        %1245 = vmatprep.subr.bf16.mxu0 0
        %1246 = vmatpush2.bf16.msra.mxu0 0
        %1247 = vmatprep.subr.bf16.mxu0 0
        %1248 = vmatpush2.bf16.msra.mxu0 0
        %1249 = vmatprep.subr.bf16.mxu0 0
        %1250 = vmatpush2.bf16.msra.mxu0 0
        %1251 = vmatprep.subr.bf16.mxu0 0
        %1252 = vmatpush2.bf16.msra.mxu0 0
        %1253 = vmatprep.mubr.bf16.mxu0 0
        %1254 = vmatmul.mubr.bf16.gmra.mxu0 %v1216
        %v1255 = vpop.f32.mrf.mxu0
        %v1256 = vadd.f32 0.0, %v1255
        %v1257 = vpop.f32.mrf.mxu0
        %v1258 = vpop.f32.mrf.mxu0
        %v1259 = vpop.f32.mrf.mxu0
        %1260 = vdwg.mxu0
        %v1262 = vsel %vm879, %v982, 0
        %v1265 = vsel %vm987, %v460, 0
        %1267 = vmatprep.subr.bf16.mxu0 0
        %1268 = vmatpush1.bf16.msra.mxu0 0
        %1269 = vmatprep.subr.bf16.mxu0 0
        %1270 = vmatpush1.bf16.msra.mxu0 0
        %1271 = vmatprep.subr.bf16.mxu0 0
        %1272 = vmatpush1.bf16.msra.mxu0 0
        %1273 = vmatprep.subr.bf16.mxu0 0
        %1274 = vmatpush1.bf16.msra.mxu0 0
        %1275 = vmatprep.subr.bf16.mxu0 0
        %1276 = vmatpush1.bf16.msra.mxu0 0
        %1277 = vmatprep.subr.bf16.mxu0 0
        %1278 = vmatpush1.bf16.msra.mxu0 0
        %1279 = vmatprep.subr.bf16.mxu0 0
        %1280 = vmatpush1.bf16.msra.mxu0 0
        %1281 = vmatprep.subr.bf16.mxu0 0
        %1282 = vmatpush1.bf16.msra.mxu0 %v1265
        %1283 = vmatprep.subr.bf16.mxu0 0
        %1284 = vmatpush2.bf16.msra.mxu0 0
        %1285 = vmatprep.subr.bf16.mxu0 0
        %1286 = vmatpush2.bf16.msra.mxu0 0
        %1287 = vmatprep.subr.bf16.mxu0 0
        %1288 = vmatpush2.bf16.msra.mxu0 0
        %1289 = vmatprep.subr.bf16.mxu0 0
        %1290 = vmatpush2.bf16.msra.mxu0 0
        %1291 = vmatprep.subr.bf16.mxu0 0
        %1292 = vmatpush2.bf16.msra.mxu0 0
        %1293 = vmatprep.subr.bf16.mxu0 0
        %1294 = vmatpush2.bf16.msra.mxu0 0
        %1295 = vmatprep.subr.bf16.mxu0 0
        %1296 = vmatpush2.bf16.msra.mxu0 0
        %1297 = vmatprep.subr.bf16.mxu0 0
        %1298 = vmatpush2.bf16.msra.mxu0 0
        %1299 = vmatprep.mubr.bf16.mxu0 0
        %1300 = vmatmul.mubr.bf16.gmra.mxu0 %v1262
        %v1301 = vpop.f32.mrf.mxu0
        %v1302 = vadd.f32 0.0, %v1301
        %v1303 = vpop.f32.mrf.mxu0
        %v1304 = vpop.f32.mrf.mxu0
        %v1305 = vpop.f32.mrf.mxu0
        %1306 = vdwg.mxu0
        %v1308 = vsel %vm879, %v983, 0
        %v1311 = vsel %vm987, %v461, 0
        %1313 = vmatprep.subr.bf16.mxu0 0
        %1314 = vmatpush1.bf16.msra.mxu0 0
        %1315 = vmatprep.subr.bf16.mxu0 0
        %1316 = vmatpush1.bf16.msra.mxu0 0
        %1317 = vmatprep.subr.bf16.mxu0 0
        %1318 = vmatpush1.bf16.msra.mxu0 0
        %1319 = vmatprep.subr.bf16.mxu0 0
        %1320 = vmatpush1.bf16.msra.mxu0 0
        %1321 = vmatprep.subr.bf16.mxu0 0
        %1322 = vmatpush1.bf16.msra.mxu0 0
        %1323 = vmatprep.subr.bf16.mxu0 0
        %1324 = vmatpush1.bf16.msra.mxu0 0
        %1325 = vmatprep.subr.bf16.mxu0 0
        %1326 = vmatpush1.bf16.msra.mxu0 0
        %1327 = vmatprep.subr.bf16.mxu0 0
        %1328 = vmatpush1.bf16.msra.mxu0 %v1311
        %1329 = vmatprep.subr.bf16.mxu0 0
        %1330 = vmatpush2.bf16.msra.mxu0 0
        %1331 = vmatprep.subr.bf16.mxu0 0
        %1332 = vmatpush2.bf16.msra.mxu0 0
        %1333 = vmatprep.subr.bf16.mxu0 0
        %1334 = vmatpush2.bf16.msra.mxu0 0
        %1335 = vmatprep.subr.bf16.mxu0 0
        %1336 = vmatpush2.bf16.msra.mxu0 0
        %1337 = vmatprep.subr.bf16.mxu0 0
        %1338 = vmatpush2.bf16.msra.mxu0 0
        %1339 = vmatprep.subr.bf16.mxu0 0
        %1340 = vmatpush2.bf16.msra.mxu0 0
        %1341 = vmatprep.subr.bf16.mxu0 0
        %1342 = vmatpush2.bf16.msra.mxu0 0
        %1343 = vmatprep.subr.bf16.mxu0 0
        %1344 = vmatpush2.bf16.msra.mxu0 0
        %1345 = vmatprep.mubr.bf16.mxu0 0
        %1346 = vmatmul.mubr.bf16.gmra.mxu0 %v1308
        %v1347 = vpop.f32.mrf.mxu0
        %v1348 = vadd.f32 0.0, %v1347
        %v1349 = vpop.f32.mrf.mxu0
        %v1350 = vpop.f32.mrf.mxu0
        %v1351 = vpop.f32.mrf.mxu0
        %1352 = vdwg.mxu0
        %1353 = vst.msk [vmem:[%s412] sm:$0xff] %vm470, %v1026
        %1354 = vst.msk [vmem:[%s412 + $0x8] sm:$0xff] %vm470, %v1072
        %1355 = vst.msk [vmem:[%s412 + $0x10] sm:$0xff] %vm470, %v1118
        %1356 = vst.msk [vmem:[%s412 + $0x18] sm:$0xff] %vm470, %v1164
        %1357 = vst.msk [vmem:[%s412 + $0x20] sm:$0xff] %vm470, %v1210
        %1358 = vst.msk [vmem:[%s412 + $0x28] sm:$0xff] %vm470, %v1256
        %1359 = vst.msk [vmem:[%s412 + $0x30] sm:$0xff] %vm470, %v1302
        %1360 = vst.msk [vmem:[%s412 + $0x38] sm:$0xff] %vm470, %v1348
        %1361 = vst.msk [vmem:[%s419] sm:$0xff] %vm879, %v968
        %1362 = vst.msk [vmem:[%s419 + $0x8] sm:$0xff] %vm879, %v969
        %1363 = vst.msk [vmem:[%s419 + $0x10] sm:$0xff] %vm879, %v970
        %1364 = vst.msk [vmem:[%s419 + $0x18] sm:$0xff] %vm879, %v971
        %1365 = vst.msk [vmem:[%s419 + $0x20] sm:$0xff] %vm879, %v972
        %1366 = vst.msk [vmem:[%s419 + $0x28] sm:$0xff] %vm879, %v973
        %1367 = vst.msk [vmem:[%s419 + $0x30] sm:$0xff] %vm879, %v974
        %1368 = vst.msk [vmem:[%s419 + $0x38] sm:$0xff] %vm879, %v975
        %s1369 = sand.u32 %s179, 1
        %s1370 = scalar_lea.sflag [#allocation4], %s1369
        %s1371 = sand.u32 %s179, 1
        %s1372 = smul.addr %s1371, 64
        %s1373 = scalar_lea.vmem [#allocation10], %s1372
        %s1374 = sand.u32 %s209, 1
        %s1375 = scalar_lea.sflag [#allocation12], %s1374
        %s1376 = sand.u32 %s209, 1
        %s1377 = smul.addr %s1376, 64
        %s1378 = scalar_lea.vmem [#allocation11], %s1377
        // Predicated region
        $region53: #{tpu_custom_call.1} parent=35 // pred_check
          %p1379 = pneg %p189
        $region54: #{tpu_custom_call.1} parent=35 // pred_check_branch
          %1381 = sbr.rel (%p1379) target = $region56
        $region55: #{tpu_custom_call.1} parent=35 // pred_region
          %s1382 = smul.u32 8, %s38
          %s1384 = ssub.s32 1024, 1024
          %1385 = vsyncadd %s1370, %s1384
          %s1386 = sadd.s32 %s39, %s1382
          %s1387 = smul.addr %s37, 8
          %s1388 = sadd.s32 %s1386, %s1387
          %s1389 = smul.addr %s1388, 128
          %s1390 = scalar_lea.hbm %s4, %s1389
          %s1391 = sshll.u32 %s1373, 4
          %s1392 = int_to_ptr.vmem [resolvable:$true] %s1391
          %1397 = dma.vmem_to_hbm [thread:$0]  %s1392, 1024, %s1390, %s1370, 128, 128, 8
        $region56: #{tpu_custom_call.1} parent=35 // pred_fallthru
          _
        // Predicated region
        $region57: #{tpu_custom_call.1} parent=35 // pred_check
          %p1398 = pneg %p219
        $region58: #{tpu_custom_call.1} parent=35 // pred_check_branch
          %1400 = sbr.rel (%p1398) target = $region60
        $region59: #{tpu_custom_call.1} parent=35 // pred_region
          %s1401 = smul.u32 8, %s38
          %s1403 = ssub.s32 1024, 1024
          %1404 = vsyncadd %s1375, %s1403
          %s1405 = sadd.s32 %s39, %s1401
          %s1406 = smul.addr %s37, 8
          %s1407 = sadd.s32 %s1405, %s1406
          %s1408 = smul.addr %s1407, 128
          %s1409 = scalar_lea.hbm %s5, %s1408
          %s1410 = sshll.u32 %s1378, 4
          %s1411 = int_to_ptr.vmem [resolvable:$true] %s1410
          %1416 = dma.vmem_to_hbm [thread:$0]  %s1411, 1024, %s1409, %s1375, 128, 128, 8
        $region60: #{tpu_custom_call.1} parent=35 // pred_fallthru
          _
      $region36: #{tpu_custom_call.1} parent=5 // pred_fallthru
        _
      %p1417 = scmp.le.s32.totalorder 2, %s27
      // Predicated region
      $region61: #{tpu_custom_call.1} parent=5 // pred_check
        %p1418 = pneg %p1417
      $region62: #{tpu_custom_call.1} parent=5 // pred_check_branch
        %1420 = sbr.rel (%p1418) target = $region64
      $region63: #{tpu_custom_call.1} parent=5 // pred_region
        %s1421 = ssub.s32 %s27, 2
        // Predicated region
        $region65: #{tpu_custom_call.1} parent=63 // pred_check
          %p1422 = pneg %p195
        $region66: #{tpu_custom_call.1} parent=63 // pred_check_branch
          %1424 = sbr.rel (%p1422) target = $region68
        $region67: #{tpu_custom_call.1} parent=63 // pred_region
          %s1425 = sand.u32 %s180, 1
          %s1426 = scalar_lea.sflag [#allocation4], %s1425
          %s1427 = sand.u32 %s180, 1
          %s1428 = smul.addr %s1427, 64
          %s1429 = scalar_lea.vmem [#allocation10], %s1428
          %1430 = dma.done %s1426, 1024
        $region68: #{tpu_custom_call.1} parent=63 // pred_fallthru
          _
        // Predicated region
        $region69: #{tpu_custom_call.1} parent=63 // pred_check
          %p1431 = pneg %p225
        $region70: #{tpu_custom_call.1} parent=63 // pred_check_branch
          %1433 = sbr.rel (%p1431) target = $region72
        $region71: #{tpu_custom_call.1} parent=63 // pred_region
          %s1434 = sand.u32 %s210, 1
          %s1435 = scalar_lea.sflag [#allocation12], %s1434
          %s1436 = sand.u32 %s210, 1
          %s1437 = smul.addr %s1436, 64
          %s1438 = scalar_lea.vmem [#allocation11], %s1437
          %1439 = dma.done %s1435, 1024
        $region72: #{tpu_custom_call.1} parent=63 // pred_fallthru
          _
      $region64: #{tpu_custom_call.1} parent=5 // pred_fallthru
        _
    $region6: #{tpu_custom_call.1} parent=1 // loop_footer
      %s31 = sadd.s32 1, %s27
    $region7: #{tpu_custom_call.1} parent=1 // loop_footer_branch
      %26 = sbr.rel target = $region3
    $region8: #{tpu_custom_call.1} parent=1 // loop_exit
      _
    %1440 = vsyncpa [#allocation3], 1
    %s1441 = scalar_lea.sflag [#allocation3], 1
    %1442 = vsyncpa %s1441, 1
    %1443 = vsyncpa [#allocation6], 1
    %s1444 = scalar_lea.sflag [#allocation6], 1
    %1445 = vsyncpa %s1444, 1
    %1446 = vsyncpa [#allocation9], 1
    %s1447 = scalar_lea.sflag [#allocation9], 1
    %1448 = vsyncpa %s1447, 1
    %1449 = vsyncpa [#allocation4], 1
    %s1450 = scalar_lea.sflag [#allocation4], 1
    %1451 = vsyncpa %s1450, 1
    %1452 = vsyncpa [#allocation12], 1
    %s1453 = scalar_lea.sflag [#allocation12], 1
    %1454 = vsyncpa %s1453, 1

</llo_original>
